<compile_context>
chip_gen: v5e
topology: v5e:2x2
jax: 0.10.0
libtpu: 0.0.40
codegen_flags: <defaults>
</compile_context>

<pallas_src>
import functools

import numpy as np
import jax
import jax.numpy as jnp
from jax import lax
from jax.experimental import pallas as pl
from jax.experimental.pallas import tpu as pltpu


# ----------------------------- Pallas kernel -------------------------------

def _dwconv_same(x, w_ref, b_ref, *, K, dilation, pad, pos, L):
    """Depthwise 'same' cross-correlation on batch-flattened rows.

    x:     (B*L, Cp) f32, rows are batch-major (row r = b*L + p).
    w_ref: (K, Cp) per-tap depthwise weights, b_ref: (1, Cp) bias.
    pos:   (B*L, 1) int32, p = r % L (position of the row within its batch).

    Tap k reads x[p + k*dilation - pad] within the same batch.  The shift is a
    pltpu.roll over the flat row axis (XLU rotate, no buffer materialization);
    rows whose source falls outside [0, L) -- which covers both zero 'same'
    padding and any cross-batch / wrap-around rows -- are masked to zero,
    matching PyTorch Conv1d exactly.
    """
    BL = x.shape[0]
    acc = jnp.zeros(x.shape, jnp.float32)
    for k in range(K):                           # static unroll
        s = k * dilation - pad                   # source-row offset
        shift = (-s) % BL
        xk = x if shift == 0 else pltpu.roll(x, shift=shift, axis=0)
        if s != 0:
            valid = (pos >= -s) & (pos < L - s)  # static bounds per tap
            xk = jnp.where(valid, xk, 0.0)
        acc = acc + xk * w_ref[k:k + 1, :]
    return acc + b_ref[...]


def attention_kernel(L,
                     x_ref,
                     w1_ref, b1_ref,      # proj_1 (1x1)
                     w0_ref, b0_ref,      # LKA.conv0 depthwise k=5 pad=2
                     ws_ref, bs_ref,      # LKA.conv_spatial dw k=7 dil=3 pad=9
                     wlk_ref, blk_ref,    # LKA.conv1 (1x1)
                     w2_ref, b2_ref,      # proj_2 (1x1)
                     o_ref):
    x = x_ref[...]                                   # (B*L, Cp) channels-last
    BL = x.shape[0]
    pos = lax.broadcasted_iota(jnp.int32, (BL, 1), 0) % L

    # proj_1: 1x1 conv == channel matmul on the MXU (f32 accumulate)
    h = jnp.dot(x, w1_ref[...], preferred_element_type=jnp.float32) + b1_ref[...]
    # exact GELU (PyTorch nn.GELU default: erf form)
    h = 0.5 * h * (1.0 + lax.erf(h * jnp.float32(0.7071067811865476)))

    u = h
    # LKA.conv0: depthwise, kernel 5, padding 2
    attn = _dwconv_same(h, w0_ref, b0_ref, K=5, dilation=1, pad=2, pos=pos, L=L)
    # LKA.conv_spatial: depthwise, kernel 7, dilation 3, padding 9
    attn = _dwconv_same(attn, ws_ref, bs_ref, K=7, dilation=3, pad=9, pos=pos, L=L)
    # LKA.conv1: 1x1 conv
    attn = jnp.dot(attn, wlk_ref[...], preferred_element_type=jnp.float32) + blk_ref[...]

    h = u * attn                                     # spatial gating

    # proj_2: 1x1 conv
    h = jnp.dot(h, w2_ref[...], preferred_element_type=jnp.float32) + b2_ref[...]
    o_ref[...] = (h + x).astype(o_ref.dtype)         # residual


# ------------------------------- wrapper ------------------------------------

def attention_pallas(x_ncl, torch_params, *, lane=128):
    """x_ncl: (B, C, L) float32.  torch_params: PyTorch-layout weights."""
    B, C, L = x_ncl.shape
    W1, b1, W0, b0, Ws, bs_, Wlk, blk, W2, b2 = torch_params
    CP = ((C + lane - 1) // lane) * lane             # lane-dense channel width

    def mat(w):    # (Cout, Cin) torch 1x1 conv -> (Cin_pad, Cout_pad) matmul
        return jnp.zeros((CP, CP), w.dtype).at[:C, :C].set(w.T)

    def vec(b):    # (C,) -> (1, Cp)
        return jnp.zeros((1, CP), b.dtype).at[0, :C].set(b)

    def dw(w):     # (C, K) depthwise -> (K, Cp)
        return jnp.zeros((w.shape[1], CP), w.dtype).at[:, :C].set(w.T)

    # NCL -> channels-last, zero-pad lanes to Cp, fold batch into the M axis.
    # TODO(synk): in a full model keep activations channels-last end-to-end so
    # these layout transposes are not an extra HBM pass around the kernel.
    x_blc = jnp.transpose(x_ncl, (0, 2, 1))                    # (B, L, C)
    x_flat = jnp.zeros((B * L, CP), x_ncl.dtype).at[:, :C].set(
        x_blc.reshape(B * L, C))

    args = (x_flat,
            mat(W1), vec(b1),
            dw(W0), vec(b0),
            dw(Ws), vec(bs_),
            mat(Wlk), vec(blk),
            mat(W2), vec(b2))

    def full(shape):
        return pl.BlockSpec(shape, lambda i: (0,) * len(shape))

    out_flat = pl.pallas_call(
        functools.partial(attention_kernel, L),
        out_shape=jax.ShapeDtypeStruct((B * L, CP), x_ncl.dtype),
        grid=(1,),                                   # whole problem: one block
        in_specs=[
            full((B * L, CP)),
            full((CP, CP)), full((1, CP)),           # proj_1
            full((5, CP)), full((1, CP)),            # LKA.conv0
            full((7, CP)), full((1, CP)),            # LKA.conv_spatial
            full((CP, CP)), full((1, CP)),           # LKA.conv1
            full((CP, CP)), full((1, CP)),           # proj_2
        ],
        out_specs=full((B * L, CP)),
        compiler_params=pltpu.CompilerParams(
            dimension_semantics=("arbitrary",)),     # single step; batch is in M
    )(*args)

    out_blc = out_flat.reshape(B, L, CP)[:, :, :C]
    return jnp.transpose(out_blc, (0, 2, 1))         # back to NCL


# ------------------------- pure-JAX reference (NCL) ------------------------

def attention_ref(x_ncl, W1, b1, W0, b0, Ws, bs, Wlk, blk, W2, b2):
    def conv1x1(x, w, b):                            # x:(B,C,L) w:(Co,Ci)
        return jnp.einsum('bcl,oc->bol', x, w) + b[None, :, None]

    def dwconv(x, w, b, dilation, pad):              # w:(C,K)
        C = x.shape[1]
        y = lax.conv_general_dilated(
            x, w[:, None, :], window_strides=(1,), padding=[(pad, pad)],
            rhs_dilation=(dilation,),
            dimension_numbers=('NCH', 'OIH', 'NCH'),
            feature_group_count=C)
        return y + b[None, :, None]

    shortcut = x_ncl
    h = conv1x1(x_ncl, W1, b1)
    h = jax.nn.gelu(h, approximate=False)
    u = h
    attn = dwconv(h, W0, b0, dilation=1, pad=2)
    attn = dwconv(attn, Ws, bs, dilation=3, pad=9)
    attn = conv1x1(attn, Wlk, blk)
    h = u * attn
    h = conv1x1(h, W2, b2)
    return h + shortcut


# --------------------------------- main -------------------------------------

if __name__ == "__main__":
    key = jax.random.PRNGKey(0)
    B, C, L = 2, 32, 16                              # d_model=32, seq len=16
    ks = jax.random.split(key, 11)

    x_ncl = jax.random.normal(ks[0], (B, C, L), jnp.float32)

    # Deterministic synthetic parameters (PyTorch-layout shapes).
    W1  = 0.2 * jax.random.normal(ks[1],  (C, C), jnp.float32)   # proj_1 (Co,Ci)
    b1  = 0.1 * jax.random.normal(ks[2],  (C,),   jnp.float32)
    W0  = 0.2 * jax.random.normal(ks[3],  (C, 5), jnp.float32)   # conv0 dw (C,K)
    b0  = 0.1 * jax.random.normal(ks[4],  (C,),   jnp.float32)
    Ws  = 0.2 * jax.random.normal(ks[5],  (C, 7), jnp.float32)   # conv_spatial dw
    bs_ = 0.1 * jax.random.normal(ks[6],  (C,),   jnp.float32)
    Wlk = 0.2 * jax.random.normal(ks[7],  (C, C), jnp.float32)   # LKA.conv1
    blk = 0.1 * jax.random.normal(ks[8],  (C,),   jnp.float32)
    W2  = 0.2 * jax.random.normal(ks[9],  (C, C), jnp.float32)   # proj_2
    b2  = 0.1 * jax.random.normal(ks[10], (C,),   jnp.float32)

    params = (W1, b1, W0, b0, Ws, bs_, Wlk, blk, W2, b2)

    out_ncl = attention_pallas(x_ncl, params)
    jax.block_until_ready(out_ncl)

    ref = attention_ref(x_ncl, W1, b1, W0, b0, Ws, bs_, Wlk, blk, W2, b2)
    np.testing.assert_allclose(np.asarray(out_ncl), np.asarray(ref),
                               atol=1e-4, rtol=1e-4)
    print("KERNEL_OK")
</pallas_src>

<mosaic_0001>
module attributes {stable_mosaic.version = 11 : i64} {
  func.func @attention_kernel(%arg0: i32, %arg1: memref<32x128xf32, #tpu.memory_space<vmem>>, %arg2: memref<128x128xf32, #tpu.memory_space<vmem>>, %arg3: memref<1x128xf32, #tpu.memory_space<vmem>>, %arg4: memref<5x128xf32, #tpu.memory_space<vmem>>, %arg5: memref<1x128xf32, #tpu.memory_space<vmem>>, %arg6: memref<7x128xf32, #tpu.memory_space<vmem>>, %arg7: memref<1x128xf32, #tpu.memory_space<vmem>>, %arg8: memref<128x128xf32, #tpu.memory_space<vmem>>, %arg9: memref<1x128xf32, #tpu.memory_space<vmem>>, %arg10: memref<128x128xf32, #tpu.memory_space<vmem>>, %arg11: memref<1x128xf32, #tpu.memory_space<vmem>>, %arg12: memref<32x128xf32, #tpu.memory_space<vmem>>) attributes {dimension_semantics = [#tpu.dimension_semantics<arbitrary>], iteration_bounds = array<i64: 1>, scalar_prefetch = 0 : i64, scratch_operands = 0 : i64, tpu.core_type = #tpu.core_type<tc>, window_params = [{pipeline_mode = #tpu.pipeline_mode<synchronous>, transform_indices = @transform_0, window_bounds = array<i64: 32, 128>}, {pipeline_mode = #tpu.pipeline_mode<synchronous>, transform_indices = @transform_1, window_bounds = array<i64: 128, 128>}, {pipeline_mode = #tpu.pipeline_mode<synchronous>, transform_indices = @transform_2, window_bounds = array<i64: 1, 128>}, {pipeline_mode = #tpu.pipeline_mode<synchronous>, transform_indices = @transform_3, window_bounds = array<i64: 5, 128>}, {pipeline_mode = #tpu.pipeline_mode<synchronous>, transform_indices = @transform_4, window_bounds = array<i64: 1, 128>}, {pipeline_mode = #tpu.pipeline_mode<synchronous>, transform_indices = @transform_5, window_bounds = array<i64: 7, 128>}, {pipeline_mode = #tpu.pipeline_mode<synchronous>, transform_indices = @transform_6, window_bounds = array<i64: 1, 128>}, {pipeline_mode = #tpu.pipeline_mode<synchronous>, transform_indices = @transform_7, window_bounds = array<i64: 128, 128>}, {pipeline_mode = #tpu.pipeline_mode<synchronous>, transform_indices = @transform_8, window_bounds = array<i64: 1, 128>}, {pipeline_mode = #tpu.pipeline_mode<synchronous>, transform_indices = @transform_9, window_bounds = array<i64: 128, 128>}, {pipeline_mode = #tpu.pipeline_mode<synchronous>, transform_indices = @transform_10, window_bounds = array<i64: 1, 128>}, {pipeline_mode = #tpu.pipeline_mode<synchronous>, transform_indices = @transform_11, window_bounds = array<i64: 32, 128>}]} {
    %c0 = arith.constant 0 : index
    %c0_0 = arith.constant 0 : index
    %0 = vector.load %arg1[%c0, %c0_0] : memref<32x128xf32, #tpu.memory_space<vmem>>, vector<32x128xf32>
    %1 = tpu.iota {dimensions = array<i32: 0>} : vector<32x1xi32>
    %c16_i32 = arith.constant 16 : i32
    %c0_i32 = arith.constant 0 : i32
    %2 = arith.cmpi eq, %c16_i32, %c0_i32 : i32
    %c1_i32 = arith.constant 1 : i32
    %3 = arith.select %2, %c1_i32, %c16_i32 : i32
    %4 = vector.broadcast %3 : i32 to vector<32x1xi32>
    %5 = arith.remsi %1, %4 : vector<32x1xi32>
    %c0_i32_1 = arith.constant 0 : i32
    %6 = vector.broadcast %c0_i32_1 : i32 to vector<32x1xi32>
    %7 = arith.cmpi ne, %5, %6 : vector<32x1xi32>
    %c0_i32_2 = arith.constant 0 : i32
    %8 = vector.broadcast %c0_i32_2 : i32 to vector<32x1xi32>
    %9 = arith.cmpi slt, %5, %8 : vector<32x1xi32>
    %c0_i32_3 = arith.constant 0 : i32
    %10 = arith.cmpi slt, %3, %c0_i32_3 : i32
    %11 = vector.broadcast %10 : i1 to vector<32x1xi1>
    %12 = vector.broadcast %11 : vector<32x1xi1> to vector<32x1xi1>
    %13 = arith.xori %9, %12 : vector<32x1xi1>
    %14 = arith.andi %13, %7 : vector<32x1xi1>
    %15 = vector.broadcast %3 : i32 to vector<32x1xi32>
    %16 = arith.addi %5, %15 : vector<32x1xi32>
    %17 = arith.select %14, %16, %5 : vector<32x1xi1>, vector<32x1xi32>
    %c0_4 = arith.constant 0 : index
    %c0_5 = arith.constant 0 : index
    %18 = vector.load %arg2[%c0_4, %c0_5] : memref<128x128xf32, #tpu.memory_space<vmem>>, vector<128x128xf32>
    %cst = arith.constant dense<0.000000e+00> : vector<32x128xf32>
    %19 = tpu.matmul %0, %18, %cst {dimension_numbers = #tpu.dot_dimension_numbers<[1], [0], [0], [1], [0, 0, 1, 1], [], []>} : vector<32x128xf32>, vector<128x128xf32>, vector<32x128xf32> -> vector<32x128xf32>
    %c0_6 = arith.constant 0 : index
    %c0_7 = arith.constant 0 : index
    %20 = vector.load %arg3[%c0_6, %c0_7] : memref<1x128xf32, #tpu.memory_space<vmem>>, vector<1x128xf32>
    %21 = vector.broadcast %20 : vector<1x128xf32> to vector<32x128xf32>
    %22 = arith.addf %19, %21 : vector<32x128xf32>
    %cst_8 = arith.constant 5.000000e-01 : f32
    %23 = vector.broadcast %cst_8 : f32 to vector<32x128xf32>
    %24 = arith.mulf %23, %22 : vector<32x128xf32>
    %cst_9 = arith.constant 0.707106769 : f32
    %25 = vector.broadcast %cst_9 : f32 to vector<32x128xf32>
    %26 = arith.mulf %22, %25 : vector<32x128xf32>
    %27 = math.erf %26 : vector<32x128xf32>
    %cst_10 = arith.constant 1.000000e+00 : f32
    %28 = vector.broadcast %cst_10 : f32 to vector<32x128xf32>
    %29 = arith.addf %28, %27 : vector<32x128xf32>
    %30 = arith.mulf %24, %29 : vector<32x128xf32>
    %cst_11 = arith.constant 0.000000e+00 : f32
    %31 = vector.broadcast %cst_11 : f32 to vector<32x128xf32>
    %c2_i32 = arith.constant 2 : i32
    %32 = tpu.dynamic_rotate %30 by %c2_i32 dim 0 : vector<32x128xf32>, i32 -> vector<32x128xf32>
    %c2_i32_12 = arith.constant 2 : i32
    %33 = vector.broadcast %c2_i32_12 : i32 to vector<32x1xi32>
    %34 = arith.cmpi sge, %17, %33 : vector<32x1xi32>
    %c18_i32 = arith.constant 18 : i32
    %35 = vector.broadcast %c18_i32 : i32 to vector<32x1xi32>
    %36 = arith.cmpi slt, %17, %35 : vector<32x1xi32>
    %37 = arith.andi %34, %36 : vector<32x1xi1>
    %cst_13 = arith.constant 0.000000e+00 : f32
    %38 = vector.shape_cast %37 : vector<32x1xi1> to vector<32x1xi1>
    %39 = vector.broadcast %38 : vector<32x1xi1> to vector<32x128xi1>
    %40 = vector.broadcast %cst_13 : f32 to vector<32x128xf32>
    %41 = arith.select %39, %32, %40 : vector<32x128xi1>, vector<32x128xf32>
    %c0_14 = arith.constant 0 : index
    %c0_15 = arith.constant 0 : index
    %42 = vector.load %arg4[%c0_14, %c0_15] : memref<5x128xf32, #tpu.memory_space<vmem>>, vector<1x128xf32>
    %43 = vector.broadcast %42 : vector<1x128xf32> to vector<32x128xf32>
    %44 = arith.mulf %41, %43 : vector<32x128xf32>
    %45 = arith.addf %31, %44 : vector<32x128xf32>
    %c1_i32_16 = arith.constant 1 : i32
    %46 = tpu.dynamic_rotate %30 by %c1_i32_16 dim 0 : vector<32x128xf32>, i32 -> vector<32x128xf32>
    %c1_i32_17 = arith.constant 1 : i32
    %47 = vector.broadcast %c1_i32_17 : i32 to vector<32x1xi32>
    %48 = arith.cmpi sge, %17, %47 : vector<32x1xi32>
    %c17_i32 = arith.constant 17 : i32
    %49 = vector.broadcast %c17_i32 : i32 to vector<32x1xi32>
    %50 = arith.cmpi slt, %17, %49 : vector<32x1xi32>
    %51 = arith.andi %48, %50 : vector<32x1xi1>
    %cst_18 = arith.constant 0.000000e+00 : f32
    %52 = vector.shape_cast %51 : vector<32x1xi1> to vector<32x1xi1>
    %53 = vector.broadcast %52 : vector<32x1xi1> to vector<32x128xi1>
    %54 = vector.broadcast %cst_18 : f32 to vector<32x128xf32>
    %55 = arith.select %53, %46, %54 : vector<32x128xi1>, vector<32x128xf32>
    %c1 = arith.constant 1 : index
    %c0_19 = arith.constant 0 : index
    %56 = vector.load %arg4[%c1, %c0_19] : memref<5x128xf32, #tpu.memory_space<vmem>>, vector<1x128xf32>
    %57 = vector.broadcast %56 : vector<1x128xf32> to vector<32x128xf32>
    %58 = arith.mulf %55, %57 : vector<32x128xf32>
    %59 = arith.addf %45, %58 : vector<32x128xf32>
    %c2 = arith.constant 2 : index
    %c0_20 = arith.constant 0 : index
    %60 = vector.load %arg4[%c2, %c0_20] : memref<5x128xf32, #tpu.memory_space<vmem>>, vector<1x128xf32>
    %61 = vector.broadcast %60 : vector<1x128xf32> to vector<32x128xf32>
    %62 = arith.mulf %30, %61 : vector<32x128xf32>
    %63 = arith.addf %59, %62 : vector<32x128xf32>
    %c31_i32 = arith.constant 31 : i32
    %64 = tpu.dynamic_rotate %30 by %c31_i32 dim 0 : vector<32x128xf32>, i32 -> vector<32x128xf32>
    %c-1_i32 = arith.constant -1 : i32
    %65 = vector.broadcast %c-1_i32 : i32 to vector<32x1xi32>
    %66 = arith.cmpi sge, %17, %65 : vector<32x1xi32>
    %c15_i32 = arith.constant 15 : i32
    %67 = vector.broadcast %c15_i32 : i32 to vector<32x1xi32>
    %68 = arith.cmpi slt, %17, %67 : vector<32x1xi32>
    %69 = arith.andi %66, %68 : vector<32x1xi1>
    %cst_21 = arith.constant 0.000000e+00 : f32
    %70 = vector.shape_cast %69 : vector<32x1xi1> to vector<32x1xi1>
    %71 = vector.broadcast %70 : vector<32x1xi1> to vector<32x128xi1>
    %72 = vector.broadcast %cst_21 : f32 to vector<32x128xf32>
    %73 = arith.select %71, %64, %72 : vector<32x128xi1>, vector<32x128xf32>
    %c3 = arith.constant 3 : index
    %c0_22 = arith.constant 0 : index
    %74 = vector.load %arg4[%c3, %c0_22] : memref<5x128xf32, #tpu.memory_space<vmem>>, vector<1x128xf32>
    %75 = vector.broadcast %74 : vector<1x128xf32> to vector<32x128xf32>
    %76 = arith.mulf %73, %75 : vector<32x128xf32>
    %77 = arith.addf %63, %76 : vector<32x128xf32>
    %c30_i32 = arith.constant 30 : i32
    %78 = tpu.dynamic_rotate %30 by %c30_i32 dim 0 : vector<32x128xf32>, i32 -> vector<32x128xf32>
    %c-2_i32 = arith.constant -2 : i32
    %79 = vector.broadcast %c-2_i32 : i32 to vector<32x1xi32>
    %80 = arith.cmpi sge, %17, %79 : vector<32x1xi32>
    %c14_i32 = arith.constant 14 : i32
    %81 = vector.broadcast %c14_i32 : i32 to vector<32x1xi32>
    %82 = arith.cmpi slt, %17, %81 : vector<32x1xi32>
    %83 = arith.andi %80, %82 : vector<32x1xi1>
    %cst_23 = arith.constant 0.000000e+00 : f32
    %84 = vector.shape_cast %83 : vector<32x1xi1> to vector<32x1xi1>
    %85 = vector.broadcast %84 : vector<32x1xi1> to vector<32x128xi1>
    %86 = vector.broadcast %cst_23 : f32 to vector<32x128xf32>
    %87 = arith.select %85, %78, %86 : vector<32x128xi1>, vector<32x128xf32>
    %c4 = arith.constant 4 : index
    %c0_24 = arith.constant 0 : index
    %88 = vector.load %arg4[%c4, %c0_24] : memref<5x128xf32, #tpu.memory_space<vmem>>, vector<1x128xf32>
    %89 = vector.broadcast %88 : vector<1x128xf32> to vector<32x128xf32>
    %90 = arith.mulf %87, %89 : vector<32x128xf32>
    %91 = arith.addf %77, %90 : vector<32x128xf32>
    %c0_25 = arith.constant 0 : index
    %c0_26 = arith.constant 0 : index
    %92 = vector.load %arg5[%c0_25, %c0_26] : memref<1x128xf32, #tpu.memory_space<vmem>>, vector<1x128xf32>
    %93 = vector.broadcast %92 : vector<1x128xf32> to vector<32x128xf32>
    %94 = arith.addf %91, %93 : vector<32x128xf32>
    %cst_27 = arith.constant 0.000000e+00 : f32
    %95 = vector.broadcast %cst_27 : f32 to vector<32x128xf32>
    %c9_i32 = arith.constant 9 : i32
    %96 = tpu.dynamic_rotate %94 by %c9_i32 dim 0 : vector<32x128xf32>, i32 -> vector<32x128xf32>
    %c9_i32_28 = arith.constant 9 : i32
    %97 = vector.broadcast %c9_i32_28 : i32 to vector<32x1xi32>
    %98 = arith.cmpi sge, %17, %97 : vector<32x1xi32>
    %c25_i32 = arith.constant 25 : i32
    %99 = vector.broadcast %c25_i32 : i32 to vector<32x1xi32>
    %100 = arith.cmpi slt, %17, %99 : vector<32x1xi32>
    %101 = arith.andi %98, %100 : vector<32x1xi1>
    %cst_29 = arith.constant 0.000000e+00 : f32
    %102 = vector.shape_cast %101 : vector<32x1xi1> to vector<32x1xi1>
    %103 = vector.broadcast %102 : vector<32x1xi1> to vector<32x128xi1>
    %104 = vector.broadcast %cst_29 : f32 to vector<32x128xf32>
    %105 = arith.select %103, %96, %104 : vector<32x128xi1>, vector<32x128xf32>
    %c0_30 = arith.constant 0 : index
    %c0_31 = arith.constant 0 : index
    %106 = vector.load %arg6[%c0_30, %c0_31] : memref<7x128xf32, #tpu.memory_space<vmem>>, vector<1x128xf32>
    %107 = vector.broadcast %106 : vector<1x128xf32> to vector<32x128xf32>
    %108 = arith.mulf %105, %107 : vector<32x128xf32>
    %109 = arith.addf %95, %108 : vector<32x128xf32>
    %c6_i32 = arith.constant 6 : i32
    %110 = tpu.dynamic_rotate %94 by %c6_i32 dim 0 : vector<32x128xf32>, i32 -> vector<32x128xf32>
    %c6_i32_32 = arith.constant 6 : i32
    %111 = vector.broadcast %c6_i32_32 : i32 to vector<32x1xi32>
    %112 = arith.cmpi sge, %17, %111 : vector<32x1xi32>
    %c22_i32 = arith.constant 22 : i32
    %113 = vector.broadcast %c22_i32 : i32 to vector<32x1xi32>
    %114 = arith.cmpi slt, %17, %113 : vector<32x1xi32>
    %115 = arith.andi %112, %114 : vector<32x1xi1>
    %cst_33 = arith.constant 0.000000e+00 : f32
    %116 = vector.shape_cast %115 : vector<32x1xi1> to vector<32x1xi1>
    %117 = vector.broadcast %116 : vector<32x1xi1> to vector<32x128xi1>
    %118 = vector.broadcast %cst_33 : f32 to vector<32x128xf32>
    %119 = arith.select %117, %110, %118 : vector<32x128xi1>, vector<32x128xf32>
    %c1_34 = arith.constant 1 : index
    %c0_35 = arith.constant 0 : index
    %120 = vector.load %arg6[%c1_34, %c0_35] : memref<7x128xf32, #tpu.memory_space<vmem>>, vector<1x128xf32>
    %121 = vector.broadcast %120 : vector<1x128xf32> to vector<32x128xf32>
    %122 = arith.mulf %119, %121 : vector<32x128xf32>
    %123 = arith.addf %109, %122 : vector<32x128xf32>
    %c3_i32 = arith.constant 3 : i32
    %124 = tpu.dynamic_rotate %94 by %c3_i32 dim 0 : vector<32x128xf32>, i32 -> vector<32x128xf32>
    %c3_i32_36 = arith.constant 3 : i32
    %125 = vector.broadcast %c3_i32_36 : i32 to vector<32x1xi32>
    %126 = arith.cmpi sge, %17, %125 : vector<32x1xi32>
    %c19_i32 = arith.constant 19 : i32
    %127 = vector.broadcast %c19_i32 : i32 to vector<32x1xi32>
    %128 = arith.cmpi slt, %17, %127 : vector<32x1xi32>
    %129 = arith.andi %126, %128 : vector<32x1xi1>
    %cst_37 = arith.constant 0.000000e+00 : f32
    %130 = vector.shape_cast %129 : vector<32x1xi1> to vector<32x1xi1>
    %131 = vector.broadcast %130 : vector<32x1xi1> to vector<32x128xi1>
    %132 = vector.broadcast %cst_37 : f32 to vector<32x128xf32>
    %133 = arith.select %131, %124, %132 : vector<32x128xi1>, vector<32x128xf32>
    %c2_38 = arith.constant 2 : index
    %c0_39 = arith.constant 0 : index
    %134 = vector.load %arg6[%c2_38, %c0_39] : memref<7x128xf32, #tpu.memory_space<vmem>>, vector<1x128xf32>
    %135 = vector.broadcast %134 : vector<1x128xf32> to vector<32x128xf32>
    %136 = arith.mulf %133, %135 : vector<32x128xf32>
    %137 = arith.addf %123, %136 : vector<32x128xf32>
    %c3_40 = arith.constant 3 : index
    %c0_41 = arith.constant 0 : index
    %138 = vector.load %arg6[%c3_40, %c0_41] : memref<7x128xf32, #tpu.memory_space<vmem>>, vector<1x128xf32>
    %139 = vector.broadcast %138 : vector<1x128xf32> to vector<32x128xf32>
    %140 = arith.mulf %94, %139 : vector<32x128xf32>
    %141 = arith.addf %137, %140 : vector<32x128xf32>
    %c29_i32 = arith.constant 29 : i32
    %142 = tpu.dynamic_rotate %94 by %c29_i32 dim 0 : vector<32x128xf32>, i32 -> vector<32x128xf32>
    %c-3_i32 = arith.constant -3 : i32
    %143 = vector.broadcast %c-3_i32 : i32 to vector<32x1xi32>
    %144 = arith.cmpi sge, %17, %143 : vector<32x1xi32>
    %c13_i32 = arith.constant 13 : i32
    %145 = vector.broadcast %c13_i32 : i32 to vector<32x1xi32>
    %146 = arith.cmpi slt, %17, %145 : vector<32x1xi32>
    %147 = arith.andi %144, %146 : vector<32x1xi1>
    %cst_42 = arith.constant 0.000000e+00 : f32
    %148 = vector.shape_cast %147 : vector<32x1xi1> to vector<32x1xi1>
    %149 = vector.broadcast %148 : vector<32x1xi1> to vector<32x128xi1>
    %150 = vector.broadcast %cst_42 : f32 to vector<32x128xf32>
    %151 = arith.select %149, %142, %150 : vector<32x128xi1>, vector<32x128xf32>
    %c4_43 = arith.constant 4 : index
    %c0_44 = arith.constant 0 : index
    %152 = vector.load %arg6[%c4_43, %c0_44] : memref<7x128xf32, #tpu.memory_space<vmem>>, vector<1x128xf32>
    %153 = vector.broadcast %152 : vector<1x128xf32> to vector<32x128xf32>
    %154 = arith.mulf %151, %153 : vector<32x128xf32>
    %155 = arith.addf %141, %154 : vector<32x128xf32>
    %c26_i32 = arith.constant 26 : i32
    %156 = tpu.dynamic_rotate %94 by %c26_i32 dim 0 : vector<32x128xf32>, i32 -> vector<32x128xf32>
    %c-6_i32 = arith.constant -6 : i32
    %157 = vector.broadcast %c-6_i32 : i32 to vector<32x1xi32>
    %158 = arith.cmpi sge, %17, %157 : vector<32x1xi32>
    %c10_i32 = arith.constant 10 : i32
    %159 = vector.broadcast %c10_i32 : i32 to vector<32x1xi32>
    %160 = arith.cmpi slt, %17, %159 : vector<32x1xi32>
    %161 = arith.andi %158, %160 : vector<32x1xi1>
    %cst_45 = arith.constant 0.000000e+00 : f32
    %162 = vector.shape_cast %161 : vector<32x1xi1> to vector<32x1xi1>
    %163 = vector.broadcast %162 : vector<32x1xi1> to vector<32x128xi1>
    %164 = vector.broadcast %cst_45 : f32 to vector<32x128xf32>
    %165 = arith.select %163, %156, %164 : vector<32x128xi1>, vector<32x128xf32>
    %c5 = arith.constant 5 : index
    %c0_46 = arith.constant 0 : index
    %166 = vector.load %arg6[%c5, %c0_46] : memref<7x128xf32, #tpu.memory_space<vmem>>, vector<1x128xf32>
    %167 = vector.broadcast %166 : vector<1x128xf32> to vector<32x128xf32>
    %168 = arith.mulf %165, %167 : vector<32x128xf32>
    %169 = arith.addf %155, %168 : vector<32x128xf32>
    %c23_i32 = arith.constant 23 : i32
    %170 = tpu.dynamic_rotate %94 by %c23_i32 dim 0 : vector<32x128xf32>, i32 -> vector<32x128xf32>
    %c-9_i32 = arith.constant -9 : i32
    %171 = vector.broadcast %c-9_i32 : i32 to vector<32x1xi32>
    %172 = arith.cmpi sge, %17, %171 : vector<32x1xi32>
    %c7_i32 = arith.constant 7 : i32
    %173 = vector.broadcast %c7_i32 : i32 to vector<32x1xi32>
    %174 = arith.cmpi slt, %17, %173 : vector<32x1xi32>
    %175 = arith.andi %172, %174 : vector<32x1xi1>
    %cst_47 = arith.constant 0.000000e+00 : f32
    %176 = vector.shape_cast %175 : vector<32x1xi1> to vector<32x1xi1>
    %177 = vector.broadcast %176 : vector<32x1xi1> to vector<32x128xi1>
    %178 = vector.broadcast %cst_47 : f32 to vector<32x128xf32>
    %179 = arith.select %177, %170, %178 : vector<32x128xi1>, vector<32x128xf32>
    %c6 = arith.constant 6 : index
    %c0_48 = arith.constant 0 : index
    %180 = vector.load %arg6[%c6, %c0_48] : memref<7x128xf32, #tpu.memory_space<vmem>>, vector<1x128xf32>
    %181 = vector.broadcast %180 : vector<1x128xf32> to vector<32x128xf32>
    %182 = arith.mulf %179, %181 : vector<32x128xf32>
    %183 = arith.addf %169, %182 : vector<32x128xf32>
    %c0_49 = arith.constant 0 : index
    %c0_50 = arith.constant 0 : index
    %184 = vector.load %arg7[%c0_49, %c0_50] : memref<1x128xf32, #tpu.memory_space<vmem>>, vector<1x128xf32>
    %185 = vector.broadcast %184 : vector<1x128xf32> to vector<32x128xf32>
    %186 = arith.addf %183, %185 : vector<32x128xf32>
    %c0_51 = arith.constant 0 : index
    %c0_52 = arith.constant 0 : index
    %187 = vector.load %arg8[%c0_51, %c0_52] : memref<128x128xf32, #tpu.memory_space<vmem>>, vector<128x128xf32>
    %cst_53 = arith.constant dense<0.000000e+00> : vector<32x128xf32>
    %188 = tpu.matmul %186, %187, %cst_53 {dimension_numbers = #tpu.dot_dimension_numbers<[1], [0], [0], [1], [0, 0, 1, 1], [], []>} : vector<32x128xf32>, vector<128x128xf32>, vector<32x128xf32> -> vector<32x128xf32>
    %c0_54 = arith.constant 0 : index
    %c0_55 = arith.constant 0 : index
    %189 = vector.load %arg9[%c0_54, %c0_55] : memref<1x128xf32, #tpu.memory_space<vmem>>, vector<1x128xf32>
    %190 = vector.broadcast %189 : vector<1x128xf32> to vector<32x128xf32>
    %191 = arith.addf %188, %190 : vector<32x128xf32>
    %192 = arith.mulf %30, %191 : vector<32x128xf32>
    %c0_56 = arith.constant 0 : index
    %c0_57 = arith.constant 0 : index
    %193 = vector.load %arg10[%c0_56, %c0_57] : memref<128x128xf32, #tpu.memory_space<vmem>>, vector<128x128xf32>
    %cst_58 = arith.constant dense<0.000000e+00> : vector<32x128xf32>
    %194 = tpu.matmul %192, %193, %cst_58 {dimension_numbers = #tpu.dot_dimension_numbers<[1], [0], [0], [1], [0, 0, 1, 1], [], []>} : vector<32x128xf32>, vector<128x128xf32>, vector<32x128xf32> -> vector<32x128xf32>
    %c0_59 = arith.constant 0 : index
    %c0_60 = arith.constant 0 : index
    %195 = vector.load %arg11[%c0_59, %c0_60] : memref<1x128xf32, #tpu.memory_space<vmem>>, vector<1x128xf32>
    %196 = vector.broadcast %195 : vector<1x128xf32> to vector<32x128xf32>
    %197 = arith.addf %194, %196 : vector<32x128xf32>
    %198 = arith.addf %197, %0 : vector<32x128xf32>
    %c0_61 = arith.constant 0 : index
    %c0_62 = arith.constant 0 : index
    %199 = vector.load %arg12[%c0_61, %c0_62] : memref<32x128xf32, #tpu.memory_space<vmem>>, vector<32x128xf32>
    tpu.vector_store %arg12[%c0_61, %c0_62], %198 {strides = array<i32>} : memref<32x128xf32, #tpu.memory_space<vmem>>, vector<32x128xf32>,
    return
  }
  func.func @transform_0(%arg0: i32) -> (i32, i32) {
    %c0_i32 = arith.constant 0 : i32
    %c0_i32_0 = arith.constant 0 : i32
    %c0_i32_1 = arith.constant 0 : i32
    return %c0_i32, %c0_i32_0 : i32, i32
  }
  func.func @transform_1(%arg0: i32) -> (i32, i32) {
    %c0_i32 = arith.constant 0 : i32
    %c0_i32_0 = arith.constant 0 : i32
    %c0_i32_1 = arith.constant 0 : i32
    return %c0_i32, %c0_i32_0 : i32, i32
  }
  func.func @transform_2(%arg0: i32) -> (i32, i32) {
    %c0_i32 = arith.constant 0 : i32
    %c0_i32_0 = arith.constant 0 : i32
    %c0_i32_1 = arith.constant 0 : i32
    return %c0_i32, %c0_i32_0 : i32, i32
  }
  func.func @transform_3(%arg0: i32) -> (i32, i32) {
    %c0_i32 = arith.constant 0 : i32
    %c0_i32_0 = arith.constant 0 : i32
    %c0_i32_1 = arith.constant 0 : i32
    return %c0_i32, %c0_i32_0 : i32, i32
  }
  func.func @transform_4(%arg0: i32) -> (i32, i32) {
    %c0_i32 = arith.constant 0 : i32
    %c0_i32_0 = arith.constant 0 : i32
    %c0_i32_1 = arith.constant 0 : i32
    return %c0_i32, %c0_i32_0 : i32, i32
  }
  func.func @transform_5(%arg0: i32) -> (i32, i32) {
    %c0_i32 = arith.constant 0 : i32
    %c0_i32_0 = arith.constant 0 : i32
    %c0_i32_1 = arith.constant 0 : i32
    return %c0_i32, %c0_i32_0 : i32, i32
  }
  func.func @transform_6(%arg0: i32) -> (i32, i32) {
    %c0_i32 = arith.constant 0 : i32
    %c0_i32_0 = arith.constant 0 : i32
    %c0_i32_1 = arith.constant 0 : i32
    return %c0_i32, %c0_i32_0 : i32, i32
  }
  func.func @transform_7(%arg0: i32) -> (i32, i32) {
    %c0_i32 = arith.constant 0 : i32
    %c0_i32_0 = arith.constant 0 : i32
    %c0_i32_1 = arith.constant 0 : i32
    return %c0_i32, %c0_i32_0 : i32, i32
  }
  func.func @transform_8(%arg0: i32) -> (i32, i32) {
    %c0_i32 = arith.constant 0 : i32
    %c0_i32_0 = arith.constant 0 : i32
    %c0_i32_1 = arith.constant 0 : i32
    return %c0_i32, %c0_i32_0 : i32, i32
  }
  func.func @transform_9(%arg0: i32) -> (i32, i32) {
    %c0_i32 = arith.constant 0 : i32
    %c0_i32_0 = arith.constant 0 : i32
    %c0_i32_1 = arith.constant 0 : i32
    return %c0_i32, %c0_i32_0 : i32, i32
  }
  func.func @transform_10(%arg0: i32) -> (i32, i32) {
    %c0_i32 = arith.constant 0 : i32
    %c0_i32_0 = arith.constant 0 : i32
    %c0_i32_1 = arith.constant 0 : i32
    return %c0_i32, %c0_i32_0 : i32, i32
  }
  func.func @transform_11(%arg0: i32) -> (i32, i32) {
    %c0_i32 = arith.constant 0 : i32
    %c0_i32_0 = arith.constant 0 : i32
    %c0_i32_1 = arith.constant 0 : i32
    return %c0_i32, %c0_i32_0 : i32, i32
  }
}

</mosaic_0001>

<llo_original>
// kernel: tpu_custom_call.1
$region0: #{tpu_custom_call.1}
  #allocation0 [shape = 'u32[]', space=smem, size = 0x4, offset = 0x4, fixed_abs, tag = 'smem constant byte address 0x4 - core index']
  #allocation1 [shape = 'u32[72,128]{1,0:T(1,128)}', space=vmem, size = 0x9000, scoped, tag = 'internal scratch']
  %s0 = inlined_call_operand.hbm [shape: f32[32,128], index: 0, kind: input, shape index: {}]
  %s1 = inlined_call_operand.hbm [shape: f32[128,128], index: 1, kind: input, shape index: {}]
  %s2 = inlined_call_operand.vmem [shape: f32[1,128], index: 2, kind: input, shape index: {}]
  %s3 = inlined_call_operand.hbm [shape: f32[5,128], index: 3, kind: input, shape index: {}]
  %s4 = inlined_call_operand.vmem [shape: f32[1,128], index: 4, kind: input, shape index: {}]
  %s5 = inlined_call_operand.hbm [shape: f32[7,128], index: 5, kind: input, shape index: {}]
  %s6 = inlined_call_operand.vmem [shape: f32[1,128], index: 6, kind: input, shape index: {}]
  %s7 = inlined_call_operand.hbm [shape: f32[128,128], index: 7, kind: input, shape index: {}]
  %s8 = inlined_call_operand.vmem [shape: f32[1,128], index: 8, kind: input, shape index: {}]
  %s9 = inlined_call_operand.hbm [shape: f32[128,128], index: 9, kind: input, shape index: {}]
  %s10 = inlined_call_operand.vmem [shape: f32[1,128], index: 10, kind: input, shape index: {}]
  %s11 = inlined_call_operand.hbm [shape: f32[32,128], index: 11, kind: output, shape index: {}]
  %s12 = sld [smem:[#allocation0]]
  $region78: #{tpu_custom_call.1} parent=0
    _
  %s14 = ssub.s32 1, %s12
  %s15 = scalar_select 0, %s14, %s12
  $region1: #{tpu_custom_call.1} parent=0
    #allocation2 [shape = 'u8[16384]{0}', space=vmem, size = 0x4000, scoped, tag = 'input window, operand 0, single buffered']
    #allocation3 [shape = 's32[1]{0}', space=sflag, size = 0x4, scoped, tag = 'scoped memory for tpu_custom_call.1']
    #allocation4 [shape = 's32[1]{0}', space=sflag, size = 0x4, scoped, tag = 'scoped memory for tpu_custom_call.1']
    #allocation5 [shape = 'u8[65536]{0}', space=vmem, size = 0x10000, scoped, tag = 'input window, operand 1, single buffered']
    #allocation6 [shape = 's32[1]{0}', space=sflag, size = 0x4, scoped, tag = 'scoped memory for tpu_custom_call.1']
    #allocation7 [shape = 'u8[4096]{0}', space=vmem, size = 0x1000, scoped, tag = 'input window, operand 3, single buffered']
    #allocation8 [shape = 'u8[4096]{0}', space=vmem, size = 0x1000, scoped, tag = 'input window, operand 5, single buffered']
    #allocation9 [shape = 's32[1]{0}', space=sflag, size = 0x4, scoped, tag = 'scoped memory for tpu_custom_call.1']
    #allocation10 [shape = 'u8[65536]{0}', space=vmem, size = 0x10000, scoped, tag = 'input window, operand 7, single buffered']
    #allocation11 [shape = 'u8[65536]{0}', space=vmem, size = 0x10000, scoped, tag = 'input window, operand 9, single buffered']
    #allocation12 [shape = 's32[1]{0}', space=sflag, size = 0x4, scoped, tag = 'scoped memory for tpu_custom_call.1']
    #allocation13 [shape = 'u8[16384]{0}', space=vmem, size = 0x4000, scoped, tag = 'output window, operand 0, single buffered']
    %16 = vsyncpa [#allocation3], 0
    %17 = vsyncpa [#allocation6], 0
    %18 = vsyncpa [#allocation9], 0
    %19 = vsyncpa [#allocation12], 0
    %20 = vsyncpa [#allocation4], 0
    // Predicated region
    $region2: #{tpu_custom_call.1} parent=1 // pred_check
      _
    $region3: #{tpu_custom_call.1} parent=1 // pred_check_branch
      %22 = sbr.rel (0) target = $region5
    $region4: #{tpu_custom_call.1} parent=1 // pred_region
      %24 = vsyncadd [#allocation3], 0
      %s25 = sshll.u32 %s0, 4
      %s26 = int_to_ptr.hbm [resolvable:$true] %s25
      %s27 = sshll.u32 [#allocation2], 4
      %s28 = int_to_ptr.vmem [resolvable:$true] %s27
      %33 = dma.hbm_to_vmem [thread:$0]  %s26, 512, %s28, [#allocation3], 128, 128, 8
    $region5: #{tpu_custom_call.1} parent=1 // pred_fallthru
      _
    // Predicated region
    $region6: #{tpu_custom_call.1} parent=1 // pred_check
      _
    $region7: #{tpu_custom_call.1} parent=1 // pred_check_branch
      %35 = sbr.rel (0) target = $region9
    $region8: #{tpu_custom_call.1} parent=1 // pred_region
      %37 = vsyncadd [#allocation6], 0
      %s38 = sshll.u32 %s1, 4
      %s39 = int_to_ptr.hbm [resolvable:$true] %s38
      %s40 = sshll.u32 [#allocation5], 4
      %s41 = int_to_ptr.vmem [resolvable:$true] %s40
      %46 = dma.hbm_to_vmem [thread:$0]  %s39, 2048, %s41, [#allocation6], 128, 128, 8
    $region9: #{tpu_custom_call.1} parent=1 // pred_fallthru
      _
    // Predicated region
    $region10: #{tpu_custom_call.1} parent=1 // pred_check
      _
    $region11: #{tpu_custom_call.1} parent=1 // pred_check_branch
      %48 = sbr.rel (0) target = $region13
    $region12: #{tpu_custom_call.1} parent=1 // pred_region
      _
    $region13: #{tpu_custom_call.1} parent=1 // pred_fallthru
      _
    // Predicated region
    $region14: #{tpu_custom_call.1} parent=1 // pred_check
      _
    $region15: #{tpu_custom_call.1} parent=1 // pred_check_branch
      %50 = sbr.rel (0) target = $region17
    $region16: #{tpu_custom_call.1} parent=1 // pred_region
      %52 = vsyncadd [#allocation6], 0
      %s54 = sshll.u32 %s3, 4
      %s55 = int_to_ptr.hbm [resolvable:$true] %s54
      %s56 = sshll.u32 [#allocation7], 4
      %s57 = int_to_ptr.vmem [resolvable:$true] %s56
      %59 = dma.hbm_to_vmem [thread:$0]  %s55, 128, %s57, [#allocation6]
    $region17: #{tpu_custom_call.1} parent=1 // pred_fallthru
      _
    // Predicated region
    $region18: #{tpu_custom_call.1} parent=1 // pred_check
      _
    $region19: #{tpu_custom_call.1} parent=1 // pred_check_branch
      %61 = sbr.rel (0) target = $region21
    $region20: #{tpu_custom_call.1} parent=1 // pred_region
      _
    $region21: #{tpu_custom_call.1} parent=1 // pred_fallthru
      _
    // Predicated region
    $region22: #{tpu_custom_call.1} parent=1 // pred_check
      _
    $region23: #{tpu_custom_call.1} parent=1 // pred_check_branch
      %63 = sbr.rel (0) target = $region25
    $region24: #{tpu_custom_call.1} parent=1 // pred_region
      %65 = vsyncadd [#allocation9], 0
      %s67 = sshll.u32 %s5, 4
      %s68 = int_to_ptr.hbm [resolvable:$true] %s67
      %s69 = sshll.u32 [#allocation8], 4
      %s70 = int_to_ptr.vmem [resolvable:$true] %s69
      %72 = dma.hbm_to_vmem [thread:$0]  %s68, 128, %s70, [#allocation9]
    $region25: #{tpu_custom_call.1} parent=1 // pred_fallthru
      _
    // Predicated region
    $region26: #{tpu_custom_call.1} parent=1 // pred_check
      _
    $region27: #{tpu_custom_call.1} parent=1 // pred_check_branch
      %74 = sbr.rel (0) target = $region29
    $region28: #{tpu_custom_call.1} parent=1 // pred_region
      _
    $region29: #{tpu_custom_call.1} parent=1 // pred_fallthru
      _
    // Predicated region
    $region30: #{tpu_custom_call.1} parent=1 // pred_check
      _
    $region31: #{tpu_custom_call.1} parent=1 // pred_check_branch
      %76 = sbr.rel (0) target = $region33
    $region32: #{tpu_custom_call.1} parent=1 // pred_region
      %78 = vsyncadd [#allocation9], 0
      %s79 = sshll.u32 %s7, 4
      %s80 = int_to_ptr.hbm [resolvable:$true] %s79
      %s81 = sshll.u32 [#allocation10], 4
      %s82 = int_to_ptr.vmem [resolvable:$true] %s81
      %87 = dma.hbm_to_vmem [thread:$0]  %s80, 2048, %s82, [#allocation9], 128, 128, 8
    $region33: #{tpu_custom_call.1} parent=1 // pred_fallthru
      _
    // Predicated region
    $region34: #{tpu_custom_call.1} parent=1 // pred_check
      _
    $region35: #{tpu_custom_call.1} parent=1 // pred_check_branch
      %89 = sbr.rel (0) target = $region37
    $region36: #{tpu_custom_call.1} parent=1 // pred_region
      _
    $region37: #{tpu_custom_call.1} parent=1 // pred_fallthru
      _
    // Predicated region
    $region38: #{tpu_custom_call.1} parent=1 // pred_check
      _
    $region39: #{tpu_custom_call.1} parent=1 // pred_check_branch
      %91 = sbr.rel (0) target = $region41
    $region40: #{tpu_custom_call.1} parent=1 // pred_region
      %93 = vsyncadd [#allocation12], 0
      %s94 = sshll.u32 %s9, 4
      %s95 = int_to_ptr.hbm [resolvable:$true] %s94
      %s96 = sshll.u32 [#allocation11], 4
      %s97 = int_to_ptr.vmem [resolvable:$true] %s96
      %102 = dma.hbm_to_vmem [thread:$0]  %s95, 2048, %s97, [#allocation12], 128, 128, 8
    $region41: #{tpu_custom_call.1} parent=1 // pred_fallthru
      _
    // Predicated region
    $region42: #{tpu_custom_call.1} parent=1 // pred_check
      _
    $region43: #{tpu_custom_call.1} parent=1 // pred_check_branch
      %104 = sbr.rel (0) target = $region45
    $region44: #{tpu_custom_call.1} parent=1 // pred_region
      _
    $region45: #{tpu_custom_call.1} parent=1 // pred_fallthru
      _
    // Predicated region
    $region46: #{tpu_custom_call.1} parent=1 // pred_check
      _
    $region47: #{tpu_custom_call.1} parent=1 // pred_check_branch
      %106 = sbr.rel (0) target = $region49
    $region48: #{tpu_custom_call.1} parent=1 // pred_region
      %108 = dma.done [#allocation3], 512
    $region49: #{tpu_custom_call.1} parent=1 // pred_fallthru
      _
    // Predicated region
    $region50: #{tpu_custom_call.1} parent=1 // pred_check
      _
    $region51: #{tpu_custom_call.1} parent=1 // pred_check_branch
      %110 = sbr.rel (0) target = $region53
    $region52: #{tpu_custom_call.1} parent=1 // pred_region
      %112 = dma.done [#allocation6], 2048
    $region53: #{tpu_custom_call.1} parent=1 // pred_fallthru
      _
    // Predicated region
    $region54: #{tpu_custom_call.1} parent=1 // pred_check
      _
    $region55: #{tpu_custom_call.1} parent=1 // pred_check_branch
      %114 = sbr.rel (0) target = $region57
    $region56: #{tpu_custom_call.1} parent=1 // pred_region
      %116 = dma.done [#allocation6], 128
    $region57: #{tpu_custom_call.1} parent=1 // pred_fallthru
      _
    // Predicated region
    $region58: #{tpu_custom_call.1} parent=1 // pred_check
      _
    $region59: #{tpu_custom_call.1} parent=1 // pred_check_branch
      %118 = sbr.rel (0) target = $region61
    $region60: #{tpu_custom_call.1} parent=1 // pred_region
      %120 = dma.done [#allocation9], 128
    $region61: #{tpu_custom_call.1} parent=1 // pred_fallthru
      _
    // Predicated region
    $region62: #{tpu_custom_call.1} parent=1 // pred_check
      _
    $region63: #{tpu_custom_call.1} parent=1 // pred_check_branch
      %122 = sbr.rel (0) target = $region65
    $region64: #{tpu_custom_call.1} parent=1 // pred_region
      %124 = dma.done [#allocation9], 2048
    $region65: #{tpu_custom_call.1} parent=1 // pred_fallthru
      _
    // Predicated region
    $region66: #{tpu_custom_call.1} parent=1 // pred_check
      _
    $region67: #{tpu_custom_call.1} parent=1 // pred_check_branch
      %126 = sbr.rel (0) target = $region69
    $region68: #{tpu_custom_call.1} parent=1 // pred_region
      %128 = dma.done [#allocation12], 2048
    $region69: #{tpu_custom_call.1} parent=1 // pred_fallthru
      _
    %v129 = vld [vmem:[#allocation2] sm:$0xff]
    %v130 = vld [vmem:[#allocation2 + $0x8] sm:$0xff]
    %v131 = vld [vmem:[#allocation2 + $0x10] sm:$0xff]
    %v132 = vld [vmem:[#allocation2 + $0x18] sm:$0xff]
    %v133 = vlaneseq
    %v134 = vshrl.u32 %v133, 7
    %v135 = vadd.s32 %v134, 8
    %v136 = vadd.s32 %v134, 16
    %v137 = vadd.s32 %v134, 24
    %vm138 = vcmp.lt.s32.totalorder %v134, 0
    %v139 = vsub.s32 0, %v134
    %v140 = vsel %vm138, %v139, %v134
    %v141 = vshrl.u32 %v140, 4
    %v142 = vand.u32 %v140, 15
    %v143 = vsub.s32 0, %v142
    %v144 = vsel %vm138, %v143, %v142
    %vm145 = vcmp.lt.s32.totalorder %v135, 0
    %v146 = vsub.s32 0, %v135
    %v147 = vsel %vm145, %v146, %v135
    %v148 = vshrl.u32 %v147, 4
    %v149 = vand.u32 %v147, 15
    %v150 = vsub.s32 0, %v149
    %v151 = vsel %vm145, %v150, %v149
    %vm152 = vcmp.lt.s32.totalorder %v136, 0
    %v153 = vsub.s32 0, %v136
    %v154 = vsel %vm152, %v153, %v136
    %v155 = vshrl.u32 %v154, 4
    %v156 = vand.u32 %v154, 15
    %v157 = vsub.s32 0, %v156
    %v158 = vsel %vm152, %v157, %v156
    %vm159 = vcmp.lt.s32.totalorder %v137, 0
    %v160 = vsub.s32 0, %v137
    %v161 = vsel %vm159, %v160, %v137
    %v162 = vshrl.u32 %v161, 4
    %v163 = vand.u32 %v161, 15
    %v164 = vsub.s32 0, %v163
    %v165 = vsel %vm159, %v164, %v163
    %vm166 = vcmp.ne.s32.totalorder %v144, 0
    %vm167 = vcmp.ne.s32.totalorder %v151, 0
    %vm168 = vcmp.ne.s32.totalorder %v158, 0
    %vm169 = vcmp.ne.s32.totalorder %v165, 0
    %vm170 = vcmp.lt.s32.totalorder %v144, 0
    %vm171 = vcmp.lt.s32.totalorder %v151, 0
    %vm172 = vcmp.lt.s32.totalorder %v158, 0
    %vm173 = vcmp.lt.s32.totalorder %v165, 0
    %vm174 = vmand %vm170, %vm166
    %vm175 = vmand %vm171, %vm167
    %vm176 = vmand %vm172, %vm168
    %vm177 = vmand %vm173, %vm169
    %v178 = vadd.s32 %v144, 16
    %v179 = vadd.s32 %v151, 16
    %v180 = vadd.s32 %v158, 16
    %v181 = vadd.s32 %v165, 16
    %v182 = vsel %vm174, %v178, %v144
    %v183 = vsel %vm175, %v179, %v151
    %v184 = vsel %vm176, %v180, %v158
    %v185 = vsel %vm177, %v181, %v165
    %v186 = vld [vmem:[#allocation5] sm:$0xff]
    %v187 = vld [vmem:[#allocation5 + $0x8] sm:$0xff]
    %v188 = vld [vmem:[#allocation5 + $0x10] sm:$0xff]
    %v189 = vld [vmem:[#allocation5 + $0x18] sm:$0xff]
    %v190 = vld [vmem:[#allocation5 + $0x20] sm:$0xff]
    %v191 = vld [vmem:[#allocation5 + $0x28] sm:$0xff]
    %v192 = vld [vmem:[#allocation5 + $0x30] sm:$0xff]
    %v193 = vld [vmem:[#allocation5 + $0x38] sm:$0xff]
    %v194 = vld [vmem:[#allocation5 + $0x40] sm:$0xff]
    %v195 = vld [vmem:[#allocation5 + $0x48] sm:$0xff]
    %v196 = vld [vmem:[#allocation5 + $0x50] sm:$0xff]
    %v197 = vld [vmem:[#allocation5 + $0x58] sm:$0xff]
    %v198 = vld [vmem:[#allocation5 + $0x60] sm:$0xff]
    %v199 = vld [vmem:[#allocation5 + $0x68] sm:$0xff]
    %v200 = vld [vmem:[#allocation5 + $0x70] sm:$0xff]
    %v201 = vld [vmem:[#allocation5 + $0x78] sm:$0xff]
    %v202 = vld [vmem:[%s2] sm:$0x1]
    %v204 = vperm.slane %v202, 0
    %206 = vmatpush.msra.mxu0 %v201
    %207 = vmatpush.msra.mxu0 %v200
    %208 = vmatpush.msra.mxu0 %v199
    %209 = vmatpush.msra.mxu0 %v198
    %210 = vmatpush.msra.mxu0 %v197
    %211 = vmatpush.msra.mxu0 %v196
    %212 = vmatpush.msra.mxu0 %v195
    %213 = vmatpush.msra.mxu0 %v194
    %214 = vmatpush.msra.mxu0 %v193
    %215 = vmatpush.msra.mxu0 %v192
    %216 = vmatpush.msra.mxu0 %v191
    %217 = vmatpush.msra.mxu0 %v190
    %218 = vmatpush.msra.mxu0 %v189
    %219 = vmatpush.msra.mxu0 %v188
    %220 = vmatpush.msra.mxu0 %v187
    %221 = vmatpush.msra.mxu0 %v186
    %222 = vmatmul.f32.gmra.mxu0 %v129
    %v223 = vpop.f32.mrf.mxu0
    %v224 = vadd.f32 %v204, %v223
    %225 = vmatmul.f32.gmra.mxu0 %v130
    %v226 = vpop.f32.mrf.mxu0
    %v227 = vadd.f32 %v204, %v226
    %228 = vmatmul.f32.gmra.mxu0 %v131
    %v229 = vpop.f32.mrf.mxu0
    %v230 = vadd.f32 %v204, %v229
    %231 = vmatmul.f32.gmra.mxu0 %v132
    %v232 = vpop.f32.mrf.mxu0
    %v233 = vadd.f32 %v204, %v232
    %234 = vdwg.mxu0
    %v235 = vmul.f32 %v224, 0.5
    %v236 = vmul.f32 %v227, 0.5
    %v237 = vmul.f32 %v230, 0.5
    %v238 = vmul.f32 %v233, 0.5
    %v239 = vmul.f32 %v224, 0.70710677
    %v240 = vmul.f32 %v227, 0.70710677
    %v241 = vmul.f32 %v230, 0.70710677
    %v242 = vmul.f32 %v233, 0.70710677
    %v243 = vmul.f32 %v239, %v239
    %v244 = vmin.f32 16.0, %v243
    %v245 = vmul.f32 %v244, 2.1237322e-06
    %v246 = vadd.f32 %v245, 0.00028619796
    %v247 = vmul.f32 %v244, %v246
    %v248 = vadd.f32 %v247, 0.0036580483
    %v249 = vmul.f32 %v244, %v248
    %v250 = vadd.f32 %v249, 0.05243302
    %v251 = vmul.f32 %v244, %v250
    %v252 = vadd.f32 %v251, 0.18741608
    %v253 = vmul.f32 %v244, %v252
    %v254 = vadd.f32 %v253, 1.1283791
    %v255 = vmul.f32 %v239, %v254
    %v256 = vmul.f32 %v244, 3.8918573e-05
    %v257 = vadd.f32 %v256, 0.001143296
    %v258 = vmul.f32 %v244, %v257
    %v259 = vadd.f32 %v258, 0.014752088
    %v260 = vmul.f32 %v244, %v259
    %v261 = vadd.f32 %v260, 0.112945676
    %v262 = vmul.f32 %v244, %v261
    %v263 = vadd.f32 %v262, 0.4994258
    %v264 = vmul.f32 %v244, %v263
    %v265 = vadd.f32 %v264, 1.0
    %v266 = vrcp.pop %v265
    %v267 = vmul.f32 %v265, %v266
    %v268 = vsub.f32 1.0, %v267
    %v269 = vmul.f32 %v266, %v268
    %v270 = vadd.f32 %v266, %v269
    %vm271 = vweird.f32 %v265
    %vm272 = vweird.f32 %v266
    %vm273 = vmor %vm271, %vm272
    %v274 = vsel %vm273, %v266, %v270
    %v275 = vand.u32 2147483647, %v265
    %vm276 = vcmp.eq.f32.partialorder %v275, 8.507059e+37
    %v277 = vand.u32 %v265, 2147483648
    %v278 = vor.u32 1.1754944e-38, %v277
    %v279 = vsel %vm276, %v278, %v274
    %v280 = vmul.f32 %v255, %v279
    %v281 = vmin.f32 %v280, 1.0
    %v282 = vmax.f32 %v281, -1.0
    %v283 = vmul.f32 %v240, %v240
    %v284 = vmin.f32 16.0, %v283
    %v285 = vmul.f32 %v284, 2.1237322e-06
    %v286 = vadd.f32 %v285, 0.00028619796
    %v287 = vmul.f32 %v284, %v286
    %v288 = vadd.f32 %v287, 0.0036580483
    %v289 = vmul.f32 %v284, %v288
    %v290 = vadd.f32 %v289, 0.05243302
    %v291 = vmul.f32 %v284, %v290
    %v292 = vadd.f32 %v291, 0.18741608
    %v293 = vmul.f32 %v284, %v292
    %v294 = vadd.f32 %v293, 1.1283791
    %v295 = vmul.f32 %v240, %v294
    %v296 = vmul.f32 %v284, 3.8918573e-05
    %v297 = vadd.f32 %v296, 0.001143296
    %v298 = vmul.f32 %v284, %v297
    %v299 = vadd.f32 %v298, 0.014752088
    %v300 = vmul.f32 %v284, %v299
    %v301 = vadd.f32 %v300, 0.112945676
    %v302 = vmul.f32 %v284, %v301
    %v303 = vadd.f32 %v302, 0.4994258
    %v304 = vmul.f32 %v284, %v303
    %v305 = vadd.f32 %v304, 1.0
    %v306 = vrcp.pop %v305
    %v307 = vmul.f32 %v305, %v306
    %v308 = vsub.f32 1.0, %v307
    %v309 = vmul.f32 %v306, %v308
    %v310 = vadd.f32 %v306, %v309
    %vm311 = vweird.f32 %v305
    %vm312 = vweird.f32 %v306
    %vm313 = vmor %vm311, %vm312
    %v314 = vsel %vm313, %v306, %v310
    %v315 = vand.u32 2147483647, %v305
    %vm316 = vcmp.eq.f32.partialorder %v315, 8.507059e+37
    %v317 = vand.u32 %v305, 2147483648
    %v318 = vor.u32 1.1754944e-38, %v317
    %v319 = vsel %vm316, %v318, %v314
    %v320 = vmul.f32 %v295, %v319
    %v321 = vmin.f32 %v320, 1.0
    %v322 = vmax.f32 %v321, -1.0
    %v323 = vmul.f32 %v241, %v241
    %v324 = vmin.f32 16.0, %v323
    %v325 = vmul.f32 %v324, 2.1237322e-06
    %v326 = vadd.f32 %v325, 0.00028619796
    %v327 = vmul.f32 %v324, %v326
    %v328 = vadd.f32 %v327, 0.0036580483
    %v329 = vmul.f32 %v324, %v328
    %v330 = vadd.f32 %v329, 0.05243302
    %v331 = vmul.f32 %v324, %v330
    %v332 = vadd.f32 %v331, 0.18741608
    %v333 = vmul.f32 %v324, %v332
    %v334 = vadd.f32 %v333, 1.1283791
    %v335 = vmul.f32 %v241, %v334
    %v336 = vmul.f32 %v324, 3.8918573e-05
    %v337 = vadd.f32 %v336, 0.001143296
    %v338 = vmul.f32 %v324, %v337
    %v339 = vadd.f32 %v338, 0.014752088
    %v340 = vmul.f32 %v324, %v339
    %v341 = vadd.f32 %v340, 0.112945676
    %v342 = vmul.f32 %v324, %v341
    %v343 = vadd.f32 %v342, 0.4994258
    %v344 = vmul.f32 %v324, %v343
    %v345 = vadd.f32 %v344, 1.0
    %v346 = vrcp.pop %v345
    %v347 = vmul.f32 %v345, %v346
    %v348 = vsub.f32 1.0, %v347
    %v349 = vmul.f32 %v346, %v348
    %v350 = vadd.f32 %v346, %v349
    %vm351 = vweird.f32 %v345
    %vm352 = vweird.f32 %v346
    %vm353 = vmor %vm351, %vm352
    %v354 = vsel %vm353, %v346, %v350
    %v355 = vand.u32 2147483647, %v345
    %vm356 = vcmp.eq.f32.partialorder %v355, 8.507059e+37
    %v357 = vand.u32 %v345, 2147483648
    %v358 = vor.u32 1.1754944e-38, %v357
    %v359 = vsel %vm356, %v358, %v354
    %v360 = vmul.f32 %v335, %v359
    %v361 = vmin.f32 %v360, 1.0
    %v362 = vmax.f32 %v361, -1.0
    %v363 = vmul.f32 %v242, %v242
    %v364 = vmin.f32 16.0, %v363
    %v365 = vmul.f32 %v364, 2.1237322e-06
    %v366 = vadd.f32 %v365, 0.00028619796
    %v367 = vmul.f32 %v364, %v366
    %v368 = vadd.f32 %v367, 0.0036580483
    %v369 = vmul.f32 %v364, %v368
    %v370 = vadd.f32 %v369, 0.05243302
    %v371 = vmul.f32 %v364, %v370
    %v372 = vadd.f32 %v371, 0.18741608
    %v373 = vmul.f32 %v364, %v372
    %v374 = vadd.f32 %v373, 1.1283791
    %v375 = vmul.f32 %v242, %v374
    %v376 = vmul.f32 %v364, 3.8918573e-05
    %v377 = vadd.f32 %v376, 0.001143296
    %v378 = vmul.f32 %v364, %v377
    %v379 = vadd.f32 %v378, 0.014752088
    %v380 = vmul.f32 %v364, %v379
    %v381 = vadd.f32 %v380, 0.112945676
    %v382 = vmul.f32 %v364, %v381
    %v383 = vadd.f32 %v382, 0.4994258
    %v384 = vmul.f32 %v364, %v383
    %v385 = vadd.f32 %v384, 1.0
    %v386 = vrcp.pop %v385
    %v387 = vmul.f32 %v385, %v386
    %v388 = vsub.f32 1.0, %v387
    %v389 = vmul.f32 %v386, %v388
    %v390 = vadd.f32 %v386, %v389
    %vm391 = vweird.f32 %v385
    %vm392 = vweird.f32 %v386
    %vm393 = vmor %vm391, %vm392
    %v394 = vsel %vm393, %v386, %v390
    %v395 = vand.u32 2147483647, %v385
    %vm396 = vcmp.eq.f32.partialorder %v395, 8.507059e+37
    %v397 = vand.u32 %v385, 2147483648
    %v398 = vor.u32 1.1754944e-38, %v397
    %v399 = vsel %vm396, %v398, %v394
    %v400 = vmul.f32 %v375, %v399
    %v401 = vmin.f32 %v400, 1.0
    %v402 = vmax.f32 %v401, -1.0
    %v403 = vadd.f32 %v282, 1.0
    %v404 = vadd.f32 %v322, 1.0
    %v405 = vadd.f32 %v362, 1.0
    %v406 = vadd.f32 %v402, 1.0
    %v407 = vmul.f32 %v235, %v403
    %v408 = vmul.f32 %v236, %v404
    %v409 = vmul.f32 %v237, %v405
    %v410 = vmul.f32 %v238, %v406
    %v411 = vrot.slane %v407, 6
    %v412 = vrot.slane %v408, 6
    %v413 = vrot.slane %v409, 6
    %v414 = vrot.slane %v410, 6
    %vm415 = vcmp.lt.s32.totalorder %v134, 2
    %v416 = vsel %vm415, %v413, %v414
    %v417 = vsel %vm415, %v412, %v413
    %v418 = vsel %vm415, %v411, %v412
    %v419 = vsel %vm415, %v414, %v411
    %vm420 = vcmp.ge.s32.totalorder %v182, 2
    %vm421 = vcmp.ge.s32.totalorder %v183, 2
    %vm422 = vcmp.ge.s32.totalorder %v184, 2
    %vm423 = vcmp.ge.s32.totalorder %v185, 2
    %vm424 = vcmp.lt.s32.totalorder %v182, 18
    %vm425 = vcmp.lt.s32.totalorder %v183, 18
    %vm426 = vcmp.lt.s32.totalorder %v184, 18
    %vm427 = vcmp.lt.s32.totalorder %v185, 18
    %vm428 = vmand %vm420, %vm424
    %vm429 = vmand %vm421, %vm425
    %vm430 = vmand %vm422, %vm426
    %vm431 = vmand %vm423, %vm427
    %v432 = vsel %vm428, 1, 0
    %v433 = vsel %vm429, 1, 0
    %v434 = vsel %vm430, 1, 0
    %v435 = vsel %vm431, 1, 0
    %vm436 = vcmp.eq.s32.totalorder %v432, 1
    %vm437 = vcmp.eq.s32.totalorder %v433, 1
    %vm438 = vcmp.eq.s32.totalorder %v434, 1
    %vm439 = vcmp.eq.s32.totalorder %v435, 1
    %v440 = vsel %vm436, %v419, 0.0
    %v441 = vsel %vm437, %v418, 0.0
    %v442 = vsel %vm438, %v417, 0.0
    %v443 = vsel %vm439, %v416, 0.0
    %v444 = vld [vmem:[#allocation7] sm:$0x1]
    %v445 = vperm.slane %v444, 0
    %v446 = vmul.f32 %v440, %v445
    %v447 = vmul.f32 %v441, %v445
    %v448 = vmul.f32 %v442, %v445
    %v449 = vmul.f32 %v443, %v445
    %v450 = vadd.f32 %v446, 0.0
    %v451 = vadd.f32 %v447, 0.0
    %v452 = vadd.f32 %v448, 0.0
    %v453 = vadd.f32 %v449, 0.0
    %v454 = vrot.slane %v407, 7
    %v455 = vrot.slane %v408, 7
    %v456 = vrot.slane %v409, 7
    %v457 = vrot.slane %v410, 7
    %vm458 = vcmp.lt.s32.totalorder %v134, 1
    %v459 = vsel %vm458, %v456, %v457
    %v460 = vsel %vm458, %v455, %v456
    %v461 = vsel %vm458, %v454, %v455
    %v462 = vsel %vm458, %v457, %v454
    %vm463 = vcmp.ge.s32.totalorder %v182, 1
    %vm464 = vcmp.ge.s32.totalorder %v183, 1
    %vm465 = vcmp.ge.s32.totalorder %v184, 1
    %vm466 = vcmp.ge.s32.totalorder %v185, 1
    %vm467 = vcmp.lt.s32.totalorder %v182, 17
    %vm468 = vcmp.lt.s32.totalorder %v183, 17
    %vm469 = vcmp.lt.s32.totalorder %v184, 17
    %vm470 = vcmp.lt.s32.totalorder %v185, 17
    %vm471 = vmand %vm463, %vm467
    %vm472 = vmand %vm464, %vm468
    %vm473 = vmand %vm465, %vm469
    %vm474 = vmand %vm466, %vm470
    %v475 = vsel %vm471, 1, 0
    %v476 = vsel %vm472, 1, 0
    %v477 = vsel %vm473, 1, 0
    %v478 = vsel %vm474, 1, 0
    %vm479 = vcmp.eq.s32.totalorder %v475, 1
    %vm480 = vcmp.eq.s32.totalorder %v476, 1
    %vm481 = vcmp.eq.s32.totalorder %v477, 1
    %vm482 = vcmp.eq.s32.totalorder %v478, 1
    %v483 = vsel %vm479, %v462, 0.0
    %v484 = vsel %vm480, %v461, 0.0
    %v485 = vsel %vm481, %v460, 0.0
    %v486 = vsel %vm482, %v459, 0.0
    %v487 = vld [vmem:[#allocation7 + $0x1] sm:$0x1]
    %v488 = vperm.slane %v487, 0
    %v489 = vmul.f32 %v483, %v488
    %v490 = vmul.f32 %v484, %v488
    %v491 = vmul.f32 %v485, %v488
    %v492 = vmul.f32 %v486, %v488
    %v493 = vadd.f32 %v450, %v489
    %v494 = vadd.f32 %v451, %v490
    %v495 = vadd.f32 %v452, %v491
    %v496 = vadd.f32 %v453, %v492
    %v497 = vld [vmem:[#allocation7 + $0x2] sm:$0x1]
    %v498 = vperm.slane %v497, 0
    %v499 = vmul.f32 %v407, %v498
    %v500 = vmul.f32 %v408, %v498
    %v501 = vmul.f32 %v409, %v498
    %v502 = vmul.f32 %v410, %v498
    %v503 = vadd.f32 %v493, %v499
    %v504 = vadd.f32 %v494, %v500
    %v505 = vadd.f32 %v495, %v501
    %v506 = vadd.f32 %v496, %v502
    %v507 = vrot.slane %v407, 1
    %v508 = vrot.slane %v408, 1
    %v509 = vrot.slane %v409, 1
    %v510 = vrot.slane %v410, 1
    %vm511 = vcmp.lt.s32.totalorder %v134, 7
    %v512 = vsel %vm511, %v509, %v510
    %v513 = vsel %vm511, %v508, %v509
    %v514 = vsel %vm511, %v507, %v508
    %v515 = vsel %vm511, %v510, %v507
    %vm516 = vcmp.ge.s32.totalorder %v182, 4294967295
    %vm517 = vcmp.ge.s32.totalorder %v183, 4294967295
    %vm518 = vcmp.ge.s32.totalorder %v184, 4294967295
    %vm519 = vcmp.ge.s32.totalorder %v185, 4294967295
    %vm520 = vcmp.lt.s32.totalorder %v182, 15
    %vm521 = vcmp.lt.s32.totalorder %v183, 15
    %vm522 = vcmp.lt.s32.totalorder %v184, 15
    %vm523 = vcmp.lt.s32.totalorder %v185, 15
    %vm524 = vmand %vm516, %vm520
    %vm525 = vmand %vm517, %vm521
    %vm526 = vmand %vm518, %vm522
    %vm527 = vmand %vm519, %vm523
    %v528 = vsel %vm524, 1, 0
    %v529 = vsel %vm525, 1, 0
    %v530 = vsel %vm526, 1, 0
    %v531 = vsel %vm527, 1, 0
    %vm532 = vcmp.eq.s32.totalorder %v528, 1
    %vm533 = vcmp.eq.s32.totalorder %v529, 1
    %vm534 = vcmp.eq.s32.totalorder %v530, 1
    %vm535 = vcmp.eq.s32.totalorder %v531, 1
    %v536 = vsel %vm532, %v514, 0.0
    %v537 = vsel %vm533, %v513, 0.0
    %v538 = vsel %vm534, %v512, 0.0
    %v539 = vsel %vm535, %v515, 0.0
    %v540 = vld [vmem:[#allocation7 + $0x3] sm:$0x1]
    %v541 = vperm.slane %v540, 0
    %v542 = vmul.f32 %v536, %v541
    %v543 = vmul.f32 %v537, %v541
    %v544 = vmul.f32 %v538, %v541
    %v545 = vmul.f32 %v539, %v541
    %v546 = vadd.f32 %v503, %v542
    %v547 = vadd.f32 %v504, %v543
    %v548 = vadd.f32 %v505, %v544
    %v549 = vadd.f32 %v506, %v545
    %v550 = vrot.slane %v407, 2
    %v551 = vrot.slane %v408, 2
    %v552 = vrot.slane %v409, 2
    %v553 = vrot.slane %v410, 2
    %vm554 = vcmp.lt.s32.totalorder %v134, 6
    %v555 = vsel %vm554, %v552, %v553
    %v556 = vsel %vm554, %v551, %v552
    %v557 = vsel %vm554, %v550, %v551
    %v558 = vsel %vm554, %v553, %v550
    %vm559 = vcmp.ge.s32.totalorder %v182, 4294967294
    %vm560 = vcmp.ge.s32.totalorder %v183, 4294967294
    %vm561 = vcmp.ge.s32.totalorder %v184, 4294967294
    %vm562 = vcmp.ge.s32.totalorder %v185, 4294967294
    %vm563 = vcmp.lt.s32.totalorder %v182, 14
    %vm564 = vcmp.lt.s32.totalorder %v183, 14
    %vm565 = vcmp.lt.s32.totalorder %v184, 14
    %vm566 = vcmp.lt.s32.totalorder %v185, 14
    %vm567 = vmand %vm559, %vm563
    %vm568 = vmand %vm560, %vm564
    %vm569 = vmand %vm561, %vm565
    %vm570 = vmand %vm562, %vm566
    %v571 = vsel %vm567, 1, 0
    %v572 = vsel %vm568, 1, 0
    %v573 = vsel %vm569, 1, 0
    %v574 = vsel %vm570, 1, 0
    %vm575 = vcmp.eq.s32.totalorder %v571, 1
    %vm576 = vcmp.eq.s32.totalorder %v572, 1
    %vm577 = vcmp.eq.s32.totalorder %v573, 1
    %vm578 = vcmp.eq.s32.totalorder %v574, 1
    %v579 = vsel %vm575, %v557, 0.0
    %v580 = vsel %vm576, %v556, 0.0
    %v581 = vsel %vm577, %v555, 0.0
    %v582 = vsel %vm578, %v558, 0.0
    %v583 = vld [vmem:[#allocation7 + $0x4] sm:$0x1]
    %v584 = vperm.slane %v583, 0
    %v585 = vmul.f32 %v579, %v584
    %v586 = vmul.f32 %v580, %v584
    %v587 = vmul.f32 %v581, %v584
    %v588 = vmul.f32 %v582, %v584
    %v589 = vadd.f32 %v546, %v585
    %v590 = vadd.f32 %v547, %v586
    %v591 = vadd.f32 %v548, %v587
    %v592 = vadd.f32 %v549, %v588
    %v593 = vld [vmem:[%s4] sm:$0x1]
    %v595 = vperm.slane %v593, 0
    %v597 = vadd.f32 %v589, %v595
    %v598 = vadd.f32 %v590, %v595
    %v599 = vadd.f32 %v591, %v595
    %v600 = vadd.f32 %v592, %v595
    %v601 = vrot.slane %v597, 7
    %v602 = vrot.slane %v598, 7
    %v603 = vrot.slane %v599, 7
    %v604 = vrot.slane %v600, 7
    %v605 = vsel %vm458, %v603, %v604
    %v606 = vsel %vm458, %v602, %v603
    %v607 = vsel %vm458, %v601, %v602
    %v608 = vsel %vm458, %v604, %v601
    %vm609 = vcmp.ge.s32.totalorder %v182, 9
    %vm610 = vcmp.ge.s32.totalorder %v183, 9
    %vm611 = vcmp.ge.s32.totalorder %v184, 9
    %vm612 = vcmp.ge.s32.totalorder %v185, 9
    %vm613 = vcmp.lt.s32.totalorder %v182, 25
    %vm614 = vcmp.lt.s32.totalorder %v183, 25
    %vm615 = vcmp.lt.s32.totalorder %v184, 25
    %vm616 = vcmp.lt.s32.totalorder %v185, 25
    %vm617 = vmand %vm609, %vm613
    %vm618 = vmand %vm610, %vm614
    %vm619 = vmand %vm611, %vm615
    %vm620 = vmand %vm612, %vm616
    %v621 = vsel %vm617, 1, 0
    %v622 = vsel %vm618, 1, 0
    %v623 = vsel %vm619, 1, 0
    %v624 = vsel %vm620, 1, 0
    %vm625 = vcmp.eq.s32.totalorder %v621, 1
    %vm626 = vcmp.eq.s32.totalorder %v622, 1
    %vm627 = vcmp.eq.s32.totalorder %v623, 1
    %vm628 = vcmp.eq.s32.totalorder %v624, 1
    %v629 = vsel %vm625, %v605, 0.0
    %v630 = vsel %vm626, %v608, 0.0
    %v631 = vsel %vm627, %v607, 0.0
    %v632 = vsel %vm628, %v606, 0.0
    %v633 = vld [vmem:[#allocation8] sm:$0x1]
    %v634 = vperm.slane %v633, 0
    %v635 = vmul.f32 %v629, %v634
    %v636 = vmul.f32 %v630, %v634
    %v637 = vmul.f32 %v631, %v634
    %v638 = vmul.f32 %v632, %v634
    %v639 = vadd.f32 %v635, 0.0
    %v640 = vadd.f32 %v636, 0.0
    %v641 = vadd.f32 %v637, 0.0
    %v642 = vadd.f32 %v638, 0.0
    %v643 = vrot.slane %v597, 2
    %v644 = vrot.slane %v598, 2
    %v645 = vrot.slane %v599, 2
    %v646 = vrot.slane %v600, 2
    %v647 = vsel %vm554, %v645, %v646
    %v648 = vsel %vm554, %v644, %v645
    %v649 = vsel %vm554, %v643, %v644
    %v650 = vsel %vm554, %v646, %v643
    %vm651 = vcmp.ge.s32.totalorder %v182, 6
    %vm652 = vcmp.ge.s32.totalorder %v183, 6
    %vm653 = vcmp.ge.s32.totalorder %v184, 6
    %vm654 = vcmp.ge.s32.totalorder %v185, 6
    %vm655 = vcmp.lt.s32.totalorder %v182, 22
    %vm656 = vcmp.lt.s32.totalorder %v183, 22
    %vm657 = vcmp.lt.s32.totalorder %v184, 22
    %vm658 = vcmp.lt.s32.totalorder %v185, 22
    %vm659 = vmand %vm651, %vm655
    %vm660 = vmand %vm652, %vm656
    %vm661 = vmand %vm653, %vm657
    %vm662 = vmand %vm654, %vm658
    %v663 = vsel %vm659, 1, 0
    %v664 = vsel %vm660, 1, 0
    %v665 = vsel %vm661, 1, 0
    %v666 = vsel %vm662, 1, 0
    %vm667 = vcmp.eq.s32.totalorder %v663, 1
    %vm668 = vcmp.eq.s32.totalorder %v664, 1
    %vm669 = vcmp.eq.s32.totalorder %v665, 1
    %vm670 = vcmp.eq.s32.totalorder %v666, 1
    %v671 = vsel %vm667, %v650, 0.0
    %v672 = vsel %vm668, %v649, 0.0
    %v673 = vsel %vm669, %v648, 0.0
    %v674 = vsel %vm670, %v647, 0.0
    %v675 = vld [vmem:[#allocation8 + $0x1] sm:$0x1]
    %v676 = vperm.slane %v675, 0
    %v677 = vmul.f32 %v671, %v676
    %v678 = vmul.f32 %v672, %v676
    %v679 = vmul.f32 %v673, %v676
    %v680 = vmul.f32 %v674, %v676
    %v681 = vadd.f32 %v639, %v677
    %v682 = vadd.f32 %v640, %v678
    %v683 = vadd.f32 %v641, %v679
    %v684 = vadd.f32 %v642, %v680
    %v685 = vrot.slane %v597, 5
    %v686 = vrot.slane %v598, 5
    %v687 = vrot.slane %v599, 5
    %v688 = vrot.slane %v600, 5
    %vm689 = vcmp.lt.s32.totalorder %v134, 3
    %v690 = vsel %vm689, %v687, %v688
    %v691 = vsel %vm689, %v686, %v687
    %v692 = vsel %vm689, %v685, %v686
    %v693 = vsel %vm689, %v688, %v685
    %vm694 = vcmp.ge.s32.totalorder %v182, 3
    %vm695 = vcmp.ge.s32.totalorder %v183, 3
    %vm696 = vcmp.ge.s32.totalorder %v184, 3
    %vm697 = vcmp.ge.s32.totalorder %v185, 3
    %vm698 = vcmp.lt.s32.totalorder %v182, 19
    %vm699 = vcmp.lt.s32.totalorder %v183, 19
    %vm700 = vcmp.lt.s32.totalorder %v184, 19
    %vm701 = vcmp.lt.s32.totalorder %v185, 19
    %vm702 = vmand %vm694, %vm698
    %vm703 = vmand %vm695, %vm699
    %vm704 = vmand %vm696, %vm700
    %vm705 = vmand %vm697, %vm701
    %v706 = vsel %vm702, 1, 0
    %v707 = vsel %vm703, 1, 0
    %v708 = vsel %vm704, 1, 0
    %v709 = vsel %vm705, 1, 0
    %vm710 = vcmp.eq.s32.totalorder %v706, 1
    %vm711 = vcmp.eq.s32.totalorder %v707, 1
    %vm712 = vcmp.eq.s32.totalorder %v708, 1
    %vm713 = vcmp.eq.s32.totalorder %v709, 1
    %v714 = vsel %vm710, %v693, 0.0
    %v715 = vsel %vm711, %v692, 0.0
    %v716 = vsel %vm712, %v691, 0.0
    %v717 = vsel %vm713, %v690, 0.0
    %v718 = vld [vmem:[#allocation8 + $0x2] sm:$0x1]
    %v719 = vperm.slane %v718, 0
    %v720 = vmul.f32 %v714, %v719
    %v721 = vmul.f32 %v715, %v719
    %v722 = vmul.f32 %v716, %v719
    %v723 = vmul.f32 %v717, %v719
    %v724 = vadd.f32 %v681, %v720
    %v725 = vadd.f32 %v682, %v721
    %v726 = vadd.f32 %v683, %v722
    %v727 = vadd.f32 %v684, %v723
    %v728 = vld [vmem:[#allocation8 + $0x3] sm:$0x1]
    %v729 = vperm.slane %v728, 0
    %v730 = vmul.f32 %v597, %v729
    %v731 = vmul.f32 %v598, %v729
    %v732 = vmul.f32 %v599, %v729
    %v733 = vmul.f32 %v600, %v729
    %v734 = vadd.f32 %v724, %v730
    %v735 = vadd.f32 %v725, %v731
    %v736 = vadd.f32 %v726, %v732
    %v737 = vadd.f32 %v727, %v733
    %v738 = vrot.slane %v597, 3
    %v739 = vrot.slane %v598, 3
    %v740 = vrot.slane %v599, 3
    %v741 = vrot.slane %v600, 3
    %vm742 = vcmp.lt.s32.totalorder %v134, 5
    %v743 = vsel %vm742, %v740, %v741
    %v744 = vsel %vm742, %v739, %v740
    %v745 = vsel %vm742, %v738, %v739
    %v746 = vsel %vm742, %v741, %v738
    %vm747 = vcmp.ge.s32.totalorder %v182, 4294967293
    %vm748 = vcmp.ge.s32.totalorder %v183, 4294967293
    %vm749 = vcmp.ge.s32.totalorder %v184, 4294967293
    %vm750 = vcmp.ge.s32.totalorder %v185, 4294967293
    %vm751 = vcmp.lt.s32.totalorder %v182, 13
    %vm752 = vcmp.lt.s32.totalorder %v183, 13
    %vm753 = vcmp.lt.s32.totalorder %v184, 13
    %vm754 = vcmp.lt.s32.totalorder %v185, 13
    %vm755 = vmand %vm747, %vm751
    %vm756 = vmand %vm748, %vm752
    %vm757 = vmand %vm749, %vm753
    %vm758 = vmand %vm750, %vm754
    %v759 = vsel %vm755, 1, 0
    %v760 = vsel %vm756, 1, 0
    %v761 = vsel %vm757, 1, 0
    %v762 = vsel %vm758, 1, 0
    %vm763 = vcmp.eq.s32.totalorder %v759, 1
    %vm764 = vcmp.eq.s32.totalorder %v760, 1
    %vm765 = vcmp.eq.s32.totalorder %v761, 1
    %vm766 = vcmp.eq.s32.totalorder %v762, 1
    %v767 = vsel %vm763, %v745, 0.0
    %v768 = vsel %vm764, %v744, 0.0
    %v769 = vsel %vm765, %v743, 0.0
    %v770 = vsel %vm766, %v746, 0.0
    %v771 = vld [vmem:[#allocation8 + $0x4] sm:$0x1]
    %v772 = vperm.slane %v771, 0
    %v773 = vmul.f32 %v767, %v772
    %v774 = vmul.f32 %v768, %v772
    %v775 = vmul.f32 %v769, %v772
    %v776 = vmul.f32 %v770, %v772
    %v777 = vadd.f32 %v734, %v773
    %v778 = vadd.f32 %v735, %v774
    %v779 = vadd.f32 %v736, %v775
    %v780 = vadd.f32 %v737, %v776
    %v781 = vrot.slane %v597, 6
    %v782 = vrot.slane %v598, 6
    %v783 = vrot.slane %v599, 6
    %v784 = vrot.slane %v600, 6
    %v785 = vsel %vm415, %v783, %v784
    %v786 = vsel %vm415, %v782, %v783
    %v787 = vsel %vm415, %v781, %v782
    %v788 = vsel %vm415, %v784, %v781
    %vm789 = vcmp.ge.s32.totalorder %v182, 4294967290
    %vm790 = vcmp.ge.s32.totalorder %v183, 4294967290
    %vm791 = vcmp.ge.s32.totalorder %v184, 4294967290
    %vm792 = vcmp.ge.s32.totalorder %v185, 4294967290
    %vm793 = vcmp.lt.s32.totalorder %v182, 10
    %vm794 = vcmp.lt.s32.totalorder %v183, 10
    %vm795 = vcmp.lt.s32.totalorder %v184, 10
    %vm796 = vcmp.lt.s32.totalorder %v185, 10
    %vm797 = vmand %vm789, %vm793
    %vm798 = vmand %vm790, %vm794
    %vm799 = vmand %vm791, %vm795
    %vm800 = vmand %vm792, %vm796
    %v801 = vsel %vm797, 1, 0
    %v802 = vsel %vm798, 1, 0
    %v803 = vsel %vm799, 1, 0
    %v804 = vsel %vm800, 1, 0
    %vm805 = vcmp.eq.s32.totalorder %v801, 1
    %vm806 = vcmp.eq.s32.totalorder %v802, 1
    %vm807 = vcmp.eq.s32.totalorder %v803, 1
    %vm808 = vcmp.eq.s32.totalorder %v804, 1
    %v809 = vsel %vm805, %v787, 0.0
    %v810 = vsel %vm806, %v786, 0.0
    %v811 = vsel %vm807, %v785, 0.0
    %v812 = vsel %vm808, %v788, 0.0
    %v813 = vld [vmem:[#allocation8 + $0x5] sm:$0x1]
    %v814 = vperm.slane %v813, 0
    %v815 = vmul.f32 %v809, %v814
    %v816 = vmul.f32 %v810, %v814
    %v817 = vmul.f32 %v811, %v814
    %v818 = vmul.f32 %v812, %v814
    %v819 = vadd.f32 %v777, %v815
    %v820 = vadd.f32 %v778, %v816
    %v821 = vadd.f32 %v779, %v817
    %v822 = vadd.f32 %v780, %v818
    %v823 = vrot.slane %v597, 1
    %v824 = vrot.slane %v598, 1
    %v825 = vrot.slane %v599, 1
    %v826 = vrot.slane %v600, 1
    %v827 = vsel %vm511, %v825, %v826
    %v828 = vsel %vm511, %v824, %v825
    %v829 = vsel %vm511, %v823, %v824
    %v830 = vsel %vm511, %v826, %v823
    %vm831 = vcmp.ge.s32.totalorder %v182, 4294967287
    %vm832 = vcmp.ge.s32.totalorder %v183, 4294967287
    %vm833 = vcmp.ge.s32.totalorder %v184, 4294967287
    %vm834 = vcmp.ge.s32.totalorder %v185, 4294967287
    %vm835 = vcmp.lt.s32.totalorder %v182, 7
    %vm836 = vcmp.lt.s32.totalorder %v183, 7
    %vm837 = vcmp.lt.s32.totalorder %v184, 7
    %vm838 = vcmp.lt.s32.totalorder %v185, 7
    %vm839 = vmand %vm831, %vm835
    %vm840 = vmand %vm832, %vm836
    %vm841 = vmand %vm833, %vm837
    %vm842 = vmand %vm834, %vm838
    %v843 = vsel %vm839, 1, 0
    %v844 = vsel %vm840, 1, 0
    %v845 = vsel %vm841, 1, 0
    %v846 = vsel %vm842, 1, 0
    %vm847 = vcmp.eq.s32.totalorder %v843, 1
    %vm848 = vcmp.eq.s32.totalorder %v844, 1
    %vm849 = vcmp.eq.s32.totalorder %v845, 1
    %vm850 = vcmp.eq.s32.totalorder %v846, 1
    %v851 = vsel %vm847, %v828, 0.0
    %v852 = vsel %vm848, %v827, 0.0
    %v853 = vsel %vm849, %v830, 0.0
    %v854 = vsel %vm850, %v829, 0.0
    %v855 = vld [vmem:[#allocation8 + $0x6] sm:$0x1]
    %v856 = vperm.slane %v855, 0
    %v857 = vmul.f32 %v851, %v856
    %v858 = vmul.f32 %v852, %v856
    %v859 = vmul.f32 %v853, %v856
    %v860 = vmul.f32 %v854, %v856
    %v861 = vadd.f32 %v819, %v857
    %v862 = vadd.f32 %v820, %v858
    %v863 = vadd.f32 %v821, %v859
    %v864 = vadd.f32 %v822, %v860
    %v865 = vld [vmem:[%s6] sm:$0x1]
    %v867 = vperm.slane %v865, 0
    %v869 = vadd.f32 %v861, %v867
    %v870 = vadd.f32 %v862, %v867
    %v871 = vadd.f32 %v863, %v867
    %v872 = vadd.f32 %v864, %v867
    %v873 = vld [vmem:[#allocation10] sm:$0xff]
    %v874 = vld [vmem:[#allocation10 + $0x8] sm:$0xff]
    %v875 = vld [vmem:[#allocation10 + $0x10] sm:$0xff]
    %v876 = vld [vmem:[#allocation10 + $0x18] sm:$0xff]
    %v877 = vld [vmem:[#allocation10 + $0x20] sm:$0xff]
    %v878 = vld [vmem:[#allocation10 + $0x28] sm:$0xff]
    %v879 = vld [vmem:[#allocation10 + $0x30] sm:$0xff]
    %v880 = vld [vmem:[#allocation10 + $0x38] sm:$0xff]
    %v881 = vld [vmem:[#allocation10 + $0x40] sm:$0xff]
    %v882 = vld [vmem:[#allocation10 + $0x48] sm:$0xff]
    %v883 = vld [vmem:[#allocation10 + $0x50] sm:$0xff]
    %v884 = vld [vmem:[#allocation10 + $0x58] sm:$0xff]
    %v885 = vld [vmem:[#allocation10 + $0x60] sm:$0xff]
    %v886 = vld [vmem:[#allocation10 + $0x68] sm:$0xff]
    %v887 = vld [vmem:[#allocation10 + $0x70] sm:$0xff]
    %v888 = vld [vmem:[#allocation10 + $0x78] sm:$0xff]
    %v889 = vld [vmem:[%s8] sm:$0x1]
    %v891 = vperm.slane %v889, 0
    %893 = vmatpush.msra.mxu0 %v888
    %894 = vmatpush.msra.mxu0 %v887
    %895 = vmatpush.msra.mxu0 %v886
    %896 = vmatpush.msra.mxu0 %v885
    %897 = vmatpush.msra.mxu0 %v884
    %898 = vmatpush.msra.mxu0 %v883
    %899 = vmatpush.msra.mxu0 %v882
    %900 = vmatpush.msra.mxu0 %v881
    %901 = vmatpush.msra.mxu0 %v880
    %902 = vmatpush.msra.mxu0 %v879
    %903 = vmatpush.msra.mxu0 %v878
    %904 = vmatpush.msra.mxu0 %v877
    %905 = vmatpush.msra.mxu0 %v876
    %906 = vmatpush.msra.mxu0 %v875
    %907 = vmatpush.msra.mxu0 %v874
    %908 = vmatpush.msra.mxu0 %v873
    %909 = vmatmul.f32.gmra.mxu0 %v869
    %v910 = vpop.f32.mrf.mxu0
    %v911 = vadd.f32 %v891, %v910
    %912 = vmatmul.f32.gmra.mxu0 %v870
    %v913 = vpop.f32.mrf.mxu0
    %v914 = vadd.f32 %v891, %v913
    %915 = vmatmul.f32.gmra.mxu0 %v871
    %v916 = vpop.f32.mrf.mxu0
    %v917 = vadd.f32 %v891, %v916
    %918 = vmatmul.f32.gmra.mxu0 %v872
    %v919 = vpop.f32.mrf.mxu0
    %v920 = vadd.f32 %v891, %v919
    %921 = vdwg.mxu0
    %v922 = vmul.f32 %v407, %v911
    %v923 = vmul.f32 %v408, %v914
    %v924 = vmul.f32 %v409, %v917
    %v925 = vmul.f32 %v410, %v920
    %v926 = vld [vmem:[#allocation11] sm:$0xff]
    %v927 = vld [vmem:[#allocation11 + $0x8] sm:$0xff]
    %v928 = vld [vmem:[#allocation11 + $0x10] sm:$0xff]
    %v929 = vld [vmem:[#allocation11 + $0x18] sm:$0xff]
    %v930 = vld [vmem:[#allocation11 + $0x20] sm:$0xff]
    %v931 = vld [vmem:[#allocation11 + $0x28] sm:$0xff]
    %v932 = vld [vmem:[#allocation11 + $0x30] sm:$0xff]
    %v933 = vld [vmem:[#allocation11 + $0x38] sm:$0xff]
    %v934 = vld [vmem:[#allocation11 + $0x40] sm:$0xff]
    %v935 = vld [vmem:[#allocation11 + $0x48] sm:$0xff]
    %v936 = vld [vmem:[#allocation11 + $0x50] sm:$0xff]
    %v937 = vld [vmem:[#allocation11 + $0x58] sm:$0xff]
    %v938 = vld [vmem:[#allocation11 + $0x60] sm:$0xff]
    %v939 = vld [vmem:[#allocation11 + $0x68] sm:$0xff]
    %v940 = vld [vmem:[#allocation11 + $0x70] sm:$0xff]
    %v941 = vld [vmem:[#allocation11 + $0x78] sm:$0xff]
    %v942 = vld [vmem:[%s10] sm:$0x1]
    %v944 = vperm.slane %v942, 0
    %946 = vmatpush.msra.mxu0 %v941
    %947 = vmatpush.msra.mxu0 %v940
    %948 = vmatpush.msra.mxu0 %v939
    %949 = vmatpush.msra.mxu0 %v938
    %950 = vmatpush.msra.mxu0 %v937
    %951 = vmatpush.msra.mxu0 %v936
    %952 = vmatpush.msra.mxu0 %v935
    %953 = vmatpush.msra.mxu0 %v934
    %954 = vmatpush.msra.mxu0 %v933
    %955 = vmatpush.msra.mxu0 %v932
    %956 = vmatpush.msra.mxu0 %v931
    %957 = vmatpush.msra.mxu0 %v930
    %958 = vmatpush.msra.mxu0 %v929
    %959 = vmatpush.msra.mxu0 %v928
    %960 = vmatpush.msra.mxu0 %v927
    %961 = vmatpush.msra.mxu0 %v926
    %962 = vmatmul.f32.gmra.mxu0 %v922
    %v963 = vpop.f32.mrf.mxu0
    %v964 = vadd.f32 %v944, %v963
    %965 = vmatmul.f32.gmra.mxu0 %v923
    %v966 = vpop.f32.mrf.mxu0
    %v967 = vadd.f32 %v944, %v966
    %968 = vmatmul.f32.gmra.mxu0 %v924
    %v969 = vpop.f32.mrf.mxu0
    %v970 = vadd.f32 %v944, %v969
    %971 = vmatmul.f32.gmra.mxu0 %v925
    %v972 = vpop.f32.mrf.mxu0
    %v973 = vadd.f32 %v944, %v972
    %974 = vdwg.mxu0
    %v975 = vadd.f32 %v964, %v129
    %v976 = vadd.f32 %v967, %v130
    %v977 = vadd.f32 %v970, %v131
    %v978 = vadd.f32 %v973, %v132
    %979 = vst [vmem:[#allocation13] sm:$0xff] %v975
    %980 = vst [vmem:[#allocation13 + $0x8] sm:$0xff] %v976
    %981 = vst [vmem:[#allocation13 + $0x10] sm:$0xff] %v977
    %982 = vst [vmem:[#allocation13 + $0x18] sm:$0xff] %v978
    // Predicated region
    $region70: #{tpu_custom_call.1} parent=1 // pred_check
      _
    $region71: #{tpu_custom_call.1} parent=1 // pred_check_branch
      %984 = sbr.rel (0) target = $region73
    $region72: #{tpu_custom_call.1} parent=1 // pred_region
      %986 = vsyncadd [#allocation4], 0
      %s987 = sshll.u32 [#allocation13], 4
      %s988 = int_to_ptr.vmem [resolvable:$true] %s987
      %s989 = sshll.u32 %s11, 4
      %s990 = int_to_ptr.hbm [resolvable:$true] %s989
      %995 = dma.vmem_to_hbm [thread:$0]  %s988, 512, %s990, [#allocation4], 128, 128, 8
    $region73: #{tpu_custom_call.1} parent=1 // pred_fallthru
      _
    // Predicated region
    $region74: #{tpu_custom_call.1} parent=1 // pred_check
      _
    $region75: #{tpu_custom_call.1} parent=1 // pred_check_branch
      %997 = sbr.rel (0) target = $region77
    $region76: #{tpu_custom_call.1} parent=1 // pred_region
      %999 = dma.done [#allocation4], 512
    $region77: #{tpu_custom_call.1} parent=1 // pred_fallthru
      _
    %1000 = vsyncpa [#allocation3], 1
    %1001 = vsyncpa [#allocation6], 1
    %1002 = vsyncpa [#allocation9], 1
    %1003 = vsyncpa [#allocation12], 1
    %1004 = vsyncpa [#allocation4], 1

</llo_original>
